<compile_context>
chip_gen: v5e
topology: v5e:2x2
jax: 0.10.0
libtpu: 0.0.40
codegen_flags: <defaults>
</compile_context>

<pallas_src>
import jax
import jax.numpy as jnp
from jax.experimental import pallas as pl
from jax.experimental.pallas import tpu as pltpu


def _scene_disc_kernel(x_ref, w1_ref, b1_ref, w2_ref, b2_ref, w3_ref, b3_ref,
                       o_ref, h_scr):
    # ---- Layer 1: Linear(2*pose_dim, nf) + ReLU  (single fused K=2*pose_dim dot) ----
    h1 = jnp.dot(x_ref[...], w1_ref[...], preferred_element_type=jnp.float32)
    # bf16 staging scratch: halves VMEM store/load traffic for the h1 round-trip.
    h_scr[...] = jnp.maximum(h1 + b1_ref[...], 0.0).astype(jnp.bfloat16)

    # ---- Layer 2: Linear(nf, nf) + ReLU ----
    h2 = jnp.dot(h_scr[...], w2_ref[...], preferred_element_type=jnp.float32)
    h2 = jnp.maximum(h2 + b2_ref[...], 0.0)

    # ---- Layer 3: Linear(nf, 1) + Sigmoid ----
    # N=1 matmul would waste a full MXU pass; do it as a VPU mul + lane reduction.
    logits = jnp.sum(h2 * w3_ref[...], axis=-1, keepdims=True) + b3_ref[0, 0]
    o_ref[...] = jax.nn.sigmoid(logits).astype(o_ref.dtype)


def scene_discriminator_forward(pose_pair, kernel_params, *, block_b=1024):
    """pose_pair: (x1, x2), each (B, pose_dim). Returns (B, 1) sigmoid scores."""
    x1, x2 = pose_pair
    B, pose_dim = x1.shape
    w1, b1, w2, b2, w3, b3 = kernel_params
    nf = w1.shape[1]

    # Pre-packed bf16 LHS (B, 2*pose_dim): one DMA stream, one fused layer-1 dot.
    xcat = jnp.concatenate([x1, x2], axis=1).astype(jnp.bfloat16)

    tb = min(block_b, B)
    grid = (pl.cdiv(B, tb),)

    def build(single_buffer_weights):
        if single_buffer_weights:
            # Constant block index -> fetched once, stays resident; a single buffer
            # avoids double-buffer allocation for the weights (frees VMEM headroom).
            def res_spec(shp):
                return pl.BlockSpec(shp, lambda i: (0, 0),
                                    pipeline_mode=pl.Buffered(1))
        else:
            def res_spec(shp):
                return pl.BlockSpec(shp, lambda i: (0, 0))

        return pl.pallas_call(
            _scene_disc_kernel,
            out_shape=jax.ShapeDtypeStruct((B, 1), jnp.float32),
            grid_spec=pltpu.PrefetchScalarGridSpec(
                num_scalar_prefetch=0,
                grid=grid,
                in_specs=[
                    pl.BlockSpec((tb, 2 * pose_dim), lambda i: (i, 0)),  # xcat (bf16)
                    res_spec(w1.shape),                                  # w1 (2p, nf) bf16
                    res_spec(b1.shape),                                  # b1 (1, nf) f32
                    res_spec(w2.shape),                                  # w2 (nf, nf) bf16
                    res_spec(b2.shape),                                  # b2 (1, nf) f32
                    res_spec(w3.shape),                                  # w3 (1, nf) f32
                    pl.BlockSpec(memory_space=pltpu.MemorySpace.SMEM),   # b3 (1,1) scalar
                ],
                out_specs=pl.BlockSpec((tb, 1), lambda i: (i, 0)),
                scratch_shapes=[pltpu.VMEM((tb, nf), jnp.bfloat16)],
            ),
            compiler_params=pltpu.CompilerParams(
                dimension_semantics=("parallel",),
                vmem_limit_bytes=48 * 1024 * 1024,
            ),
        )

    args = (xcat, w1, b1, w2, b2, w3, b3)
    try:
        out = build(True)(*args)
        return jax.block_until_ready(out)
    except Exception:
        # Fallback if this jax build rejects single-buffered resident BlockSpecs.
        return build(False)(*args)


def init_params(key, pose_dim, nf):
    """Deterministic PyTorch-style uniform init; f32 master weights as (in, out)."""
    def linear(k, fan_in, fan_out):
        kw, kb = jax.random.split(k)
        bound = 1.0 / jnp.sqrt(fan_in)
        w = jax.random.uniform(kw, (fan_in, fan_out), jnp.float32, -bound, bound)
        b = jax.random.uniform(kb, (1, fan_out), jnp.float32, -bound, bound)
        return w, b

    k1, k2, k3 = jax.random.split(key, 3)
    w1, b1 = linear(k1, pose_dim * 2, nf)
    w2, b2 = linear(k2, nf, nf)
    w3, b3 = linear(k3, nf, 1)
    return (w1, b1, w2, b2, w3, b3)


def prepare_kernel_params(master_params):
    """Cast MXU weights to bf16 (keep w1 whole for the fused dot), w3 -> (1, nf)."""
    w1, b1, w2, b2, w3, b3 = master_params
    return (w1.astype(jnp.bfloat16), b1,
            w2.astype(jnp.bfloat16), b2,
            w3.reshape(1, -1).astype(jnp.float32), b3)


if __name__ == "__main__":
    pose_dim = 32
    nf = 64          # small stand-in for the default nf=512
    batch = 256      # two grid steps with block_b=128 (even grid -> both TCs on v7x)

    key = jax.random.PRNGKey(0)
    kp, kx1, kx2 = jax.random.split(key, 3)

    master = init_params(kp, pose_dim, nf)
    kparams = prepare_kernel_params(master)

    x1 = jax.random.normal(kx1, (batch, pose_dim), jnp.float32)
    x2 = jax.random.normal(kx2, (batch, pose_dim), jnp.float32)

    out = scene_discriminator_forward((x1, x2), kparams, block_b=128)
    out = jax.block_until_ready(out)

    # Pure-JAX f32 reference of the original module's math.
    w1, b1, w2, b2, w3, b3 = master
    xcat = jnp.concatenate([x1, x2], axis=1)
    h = jnp.maximum(xcat @ w1 + b1, 0.0)
    h = jnp.maximum(h @ w2 + b2, 0.0)
    ref = jax.nn.sigmoid(h @ w3 + b3)

    assert out.shape == (batch, 1)
    max_err = float(jnp.max(jnp.abs(out - ref)))
    # bf16 weights/activations with f32 accumulation -> loosened tolerance.
    assert max_err < 2e-2, f"max abs err {max_err}"

    print("KERNEL_OK")
</pallas_src>

<mosaic_0001>
module attributes {stable_mosaic.version = 11 : i64} {
  func.func @_scene_disc_kernel(%arg0: i32, %arg1: memref<128x64xbf16, #tpu.memory_space<vmem>>, %arg2: memref<64x64xbf16, #tpu.memory_space<vmem>>, %arg3: memref<1x64xf32, #tpu.memory_space<vmem>>, %arg4: memref<64x64xbf16, #tpu.memory_space<vmem>>, %arg5: memref<1x64xf32, #tpu.memory_space<vmem>>, %arg6: memref<1x64xf32, #tpu.memory_space<vmem>>, %arg7: memref<1x1xf32, #tpu.memory_space<smem>>, %arg8: memref<128x1xf32, #tpu.memory_space<vmem>>, %arg9: memref<128x64xbf16, #tpu.memory_space<vmem>>) attributes {dimension_semantics = [#tpu.dimension_semantics<parallel>], iteration_bounds = array<i64: 2>, scalar_prefetch = 0 : i64, scratch_operands = 1 : i64, tpu.core_type = #tpu.core_type<tc>, window_params = [{transform_indices = @transform_0, window_bounds = array<i64: 128, 64>}, {pipeline_mode = #tpu.pipeline_mode<synchronous>, transform_indices = @transform_1, window_bounds = array<i64: 64, 64>}, {pipeline_mode = #tpu.pipeline_mode<synchronous>, transform_indices = @transform_2, window_bounds = array<i64: 1, 64>}, {pipeline_mode = #tpu.pipeline_mode<synchronous>, transform_indices = @transform_3, window_bounds = array<i64: 64, 64>}, {pipeline_mode = #tpu.pipeline_mode<synchronous>, transform_indices = @transform_4, window_bounds = array<i64: 1, 64>}, {pipeline_mode = #tpu.pipeline_mode<synchronous>, transform_indices = @transform_5, window_bounds = array<i64: 1, 64>}, {transform_indices = @transform_6, window_bounds = array<i64: 1, 1>}, {transform_indices = @transform_7, window_bounds = array<i64: 128, 1>}]} {
    %c0 = arith.constant 0 : index
    %c0_0 = arith.constant 0 : index
    %0 = vector.load %arg1[%c0, %c0_0] : memref<128x64xbf16, #tpu.memory_space<vmem>>, vector<128x64xbf16>
    %c0_1 = arith.constant 0 : index
    %c0_2 = arith.constant 0 : index
    %1 = vector.load %arg2[%c0_1, %c0_2] : memref<64x64xbf16, #tpu.memory_space<vmem>>, vector<64x64xbf16>
    %cst = arith.constant dense<0.000000e+00> : vector<128x64xf32>
    %2 = tpu.matmul %0, %1, %cst {dimension_numbers = #tpu.dot_dimension_numbers<[1], [0], [0], [1], [0, 0, 1, 1], [], []>} : vector<128x64xbf16>, vector<64x64xbf16>, vector<128x64xf32> -> vector<128x64xf32>
    %c0_3 = arith.constant 0 : index
    %c0_4 = arith.constant 0 : index
    %3 = vector.load %arg3[%c0_3, %c0_4] : memref<1x64xf32, #tpu.memory_space<vmem>>, vector<1x64xf32>
    %4 = vector.broadcast %3 : vector<1x64xf32> to vector<128x64xf32>
    %5 = arith.addf %2, %4 : vector<128x64xf32>
    %cst_5 = arith.constant 0.000000e+00 : f32
    %6 = vector.broadcast %cst_5 : f32 to vector<128x64xf32>
    %7 = arith.maximumf %5, %6 : vector<128x64xf32>
    %8 = arith.truncf %7 : vector<128x64xf32> to vector<128x64xbf16>
    %c0_6 = arith.constant 0 : index
    %c0_7 = arith.constant 0 : index
    %9 = vector.load %arg9[%c0_6, %c0_7] : memref<128x64xbf16, #tpu.memory_space<vmem>>, vector<128x64xbf16>
    tpu.vector_store %arg9[%c0_6, %c0_7], %8 {strides = array<i32>} : memref<128x64xbf16, #tpu.memory_space<vmem>>, vector<128x64xbf16>,
    %c0_8 = arith.constant 0 : index
    %c0_9 = arith.constant 0 : index
    %10 = vector.load %arg9[%c0_8, %c0_9] : memref<128x64xbf16, #tpu.memory_space<vmem>>, vector<128x64xbf16>
    %c0_10 = arith.constant 0 : index
    %c0_11 = arith.constant 0 : index
    %11 = vector.load %arg4[%c0_10, %c0_11] : memref<64x64xbf16, #tpu.memory_space<vmem>>, vector<64x64xbf16>
    %cst_12 = arith.constant dense<0.000000e+00> : vector<128x64xf32>
    %12 = tpu.matmul %10, %11, %cst_12 {dimension_numbers = #tpu.dot_dimension_numbers<[1], [0], [0], [1], [0, 0, 1, 1], [], []>} : vector<128x64xbf16>, vector<64x64xbf16>, vector<128x64xf32> -> vector<128x64xf32>
    %c0_13 = arith.constant 0 : index
    %c0_14 = arith.constant 0 : index
    %13 = vector.load %arg5[%c0_13, %c0_14] : memref<1x64xf32, #tpu.memory_space<vmem>>, vector<1x64xf32>
    %14 = vector.broadcast %13 : vector<1x64xf32> to vector<128x64xf32>
    %15 = arith.addf %12, %14 : vector<128x64xf32>
    %cst_15 = arith.constant 0.000000e+00 : f32
    %16 = vector.broadcast %cst_15 : f32 to vector<128x64xf32>
    %17 = arith.maximumf %15, %16 : vector<128x64xf32>
    %c0_16 = arith.constant 0 : index
    %c0_17 = arith.constant 0 : index
    %18 = vector.load %arg6[%c0_16, %c0_17] : memref<1x64xf32, #tpu.memory_space<vmem>>, vector<1x64xf32>
    %19 = vector.broadcast %18 : vector<1x64xf32> to vector<128x64xf32>
    %20 = arith.mulf %17, %19 : vector<128x64xf32>
    %cst_18 = arith.constant dense<0.000000e+00> : vector<128xf32>
    %21 = vector.multi_reduction <add>, %20, %cst_18 [1] : vector<128x64xf32> to vector<128xf32>
    %22 = vector.shape_cast %21 : vector<128xf32> to vector<128x1xf32>
    %c0_19 = arith.constant 0 : index
    %c0_20 = arith.constant 0 : index
    %23 = memref.load %arg7[%c0_19, %c0_20] : memref<1x1xf32, #tpu.memory_space<smem>>
    %24 = vector.broadcast %23 : f32 to vector<128x1xf32>
    %25 = arith.addf %22, %24 : vector<128x1xf32>
    %26 = arith.negf %25 : vector<128x1xf32>
    %27 = math.exp %26 : vector<128x1xf32>
    %cst_21 = arith.constant 1.000000e+00 : f32
    %28 = vector.broadcast %cst_21 : f32 to vector<128x1xf32>
    %29 = arith.addf %28, %27 : vector<128x1xf32>
    %30 = arith.divf %28, %29 : vector<128x1xf32>
    %c0_22 = arith.constant 0 : index
    %c0_23 = arith.constant 0 : index
    %31 = vector.load %arg8[%c0_22, %c0_23] : memref<128x1xf32, #tpu.memory_space<vmem>>, vector<128x1xf32>
    tpu.vector_store %arg8[%c0_22, %c0_23], %30 {strides = array<i32>} : memref<128x1xf32, #tpu.memory_space<vmem>>, vector<128x1xf32>,
    return
  }
  func.func @transform_0(%arg0: i32) -> (i32, i32) {
    %c0_i32 = arith.constant 0 : i32
    %c0_i32_0 = arith.constant 0 : i32
    return %arg0, %c0_i32 : i32, i32
  }
  func.func @transform_1(%arg0: i32) -> (i32, i32) {
    %c0_i32 = arith.constant 0 : i32
    %c0_i32_0 = arith.constant 0 : i32
    %c0_i32_1 = arith.constant 0 : i32
    return %c0_i32, %c0_i32_0 : i32, i32
  }
  func.func @transform_2(%arg0: i32) -> (i32, i32) {
    %c0_i32 = arith.constant 0 : i32
    %c0_i32_0 = arith.constant 0 : i32
    %c0_i32_1 = arith.constant 0 : i32
    return %c0_i32, %c0_i32_0 : i32, i32
  }
  func.func @transform_3(%arg0: i32) -> (i32, i32) {
    %c0_i32 = arith.constant 0 : i32
    %c0_i32_0 = arith.constant 0 : i32
    %c0_i32_1 = arith.constant 0 : i32
    return %c0_i32, %c0_i32_0 : i32, i32
  }
  func.func @transform_4(%arg0: i32) -> (i32, i32) {
    %c0_i32 = arith.constant 0 : i32
    %c0_i32_0 = arith.constant 0 : i32
    %c0_i32_1 = arith.constant 0 : i32
    return %c0_i32, %c0_i32_0 : i32, i32
  }
  func.func @transform_5(%arg0: i32) -> (i32, i32) {
    %c0_i32 = arith.constant 0 : i32
    %c0_i32_0 = arith.constant 0 : i32
    %c0_i32_1 = arith.constant 0 : i32
    return %c0_i32, %c0_i32_0 : i32, i32
  }
  func.func @transform_6(%arg0: i32) -> (i32, i32) {
    %c0_i32 = arith.constant 0 : i32
    %c0_i32_0 = arith.constant 0 : i32
    %c0_i32_1 = arith.constant 0 : i32
    return %c0_i32, %c0_i32_0 : i32, i32
  }
  func.func @transform_7(%arg0: i32) -> (i32, i32) {
    %c0_i32 = arith.constant 0 : i32
    %c0_i32_0 = arith.constant 0 : i32
    return %arg0, %c0_i32 : i32, i32
  }
}

module attributes {stable_mosaic.version = 11 : i64} {
  func.func @_scene_disc_kernel(%arg0: i32, %arg1: memref<128x64xbf16, #tpu.memory_space<vmem>>, %arg2: memref<64x64xbf16, #tpu.memory_space<vmem>>, %arg3: memref<1x64xf32, #tpu.memory_space<vmem>>, %arg4: memref<64x64xbf16, #tpu.memory_space<vmem>>, %arg5: memref<1x64xf32, #tpu.memory_space<vmem>>, %arg6: memref<1x64xf32, #tpu.memory_space<vmem>>, %arg7: memref<1x1xf32, #tpu.memory_space<smem>>, %arg8: memref<128x1xf32, #tpu.memory_space<vmem>>, %arg9: memref<128x64xbf16, #tpu.memory_space<vmem>>) attributes {dimension_semantics = [#tpu.dimension_semantics<parallel>], iteration_bounds = array<i64: 2>, scalar_prefetch = 0 : i64, scratch_operands = 1 : i64, tpu.core_type = #tpu.core_type<tc>, window_params = [{transform_indices = @transform_0, window_bounds = array<i64: 128, 64>}, {pipeline_mode = #tpu.pipeline_mode<synchronous>, transform_indices = @transform_1, window_bounds = array<i64: 64, 64>}, {pipeline_mode = #tpu.pipeline_mode<synchronous>, transform_indices = @transform_2, window_bounds = array<i64: 1, 64>}, {pipeline_mode = #tpu.pipeline_mode<synchronous>, transform_indices = @transform_3, window_bounds = array<i64: 64, 64>}, {pipeline_mode = #tpu.pipeline_mode<synchronous>, transform_indices = @transform_4, window_bounds = array<i64: 1, 64>}, {pipeline_mode = #tpu.pipeline_mode<synchronous>, transform_indices = @transform_5, window_bounds = array<i64: 1, 64>}, {transform_indices = @transform_6, window_bounds = array<i64: 1, 1>}, {transform_indices = @transform_7, window_bounds = array<i64: 128, 1>}]} {
    %c0 = arith.constant 0 : index
    %c0_0 = arith.constant 0 : index
    %0 = vector.load %arg1[%c0, %c0_0] : memref<128x64xbf16, #tpu.memory_space<vmem>>, vector<128x64xbf16>
    %c0_1 = arith.constant 0 : index
    %c0_2 = arith.constant 0 : index
    %1 = vector.load %arg2[%c0_1, %c0_2] : memref<64x64xbf16, #tpu.memory_space<vmem>>, vector<64x64xbf16>
    %cst = arith.constant dense<0.000000e+00> : vector<128x64xf32>
    %2 = tpu.matmul %0, %1, %cst {dimension_numbers = #tpu.dot_dimension_numbers<[1], [0], [0], [1], [0, 0, 1, 1], [], []>} : vector<128x64xbf16>, vector<64x64xbf16>, vector<128x64xf32> -> vector<128x64xf32>
    %c0_3 = arith.constant 0 : index
    %c0_4 = arith.constant 0 : index
    %3 = vector.load %arg3[%c0_3, %c0_4] : memref<1x64xf32, #tpu.memory_space<vmem>>, vector<1x64xf32>
    %4 = vector.broadcast %3 : vector<1x64xf32> to vector<128x64xf32>
    %5 = arith.addf %2, %4 : vector<128x64xf32>
    %cst_5 = arith.constant 0.000000e+00 : f32
    %6 = vector.broadcast %cst_5 : f32 to vector<128x64xf32>
    %7 = arith.maximumf %5, %6 : vector<128x64xf32>
    %8 = arith.truncf %7 : vector<128x64xf32> to vector<128x64xbf16>
    %c0_6 = arith.constant 0 : index
    %c0_7 = arith.constant 0 : index
    %9 = vector.load %arg9[%c0_6, %c0_7] : memref<128x64xbf16, #tpu.memory_space<vmem>>, vector<128x64xbf16>
    tpu.vector_store %arg9[%c0_6, %c0_7], %8 {strides = array<i32>} : memref<128x64xbf16, #tpu.memory_space<vmem>>, vector<128x64xbf16>,
    %c0_8 = arith.constant 0 : index
    %c0_9 = arith.constant 0 : index
    %10 = vector.load %arg9[%c0_8, %c0_9] : memref<128x64xbf16, #tpu.memory_space<vmem>>, vector<128x64xbf16>
    %c0_10 = arith.constant 0 : index
    %c0_11 = arith.constant 0 : index
    %11 = vector.load %arg4[%c0_10, %c0_11] : memref<64x64xbf16, #tpu.memory_space<vmem>>, vector<64x64xbf16>
    %cst_12 = arith.constant dense<0.000000e+00> : vector<128x64xf32>
    %12 = tpu.matmul %10, %11, %cst_12 {dimension_numbers = #tpu.dot_dimension_numbers<[1], [0], [0], [1], [0, 0, 1, 1], [], []>} : vector<128x64xbf16>, vector<64x64xbf16>, vector<128x64xf32> -> vector<128x64xf32>
    %c0_13 = arith.constant 0 : index
    %c0_14 = arith.constant 0 : index
    %13 = vector.load %arg5[%c0_13, %c0_14] : memref<1x64xf32, #tpu.memory_space<vmem>>, vector<1x64xf32>
    %14 = vector.broadcast %13 : vector<1x64xf32> to vector<128x64xf32>
    %15 = arith.addf %12, %14 : vector<128x64xf32>
    %cst_15 = arith.constant 0.000000e+00 : f32
    %16 = vector.broadcast %cst_15 : f32 to vector<128x64xf32>
    %17 = arith.maximumf %15, %16 : vector<128x64xf32>
    %c0_16 = arith.constant 0 : index
    %c0_17 = arith.constant 0 : index
    %18 = vector.load %arg6[%c0_16, %c0_17] : memref<1x64xf32, #tpu.memory_space<vmem>>, vector<1x64xf32>
    %19 = vector.broadcast %18 : vector<1x64xf32> to vector<128x64xf32>
    %20 = arith.mulf %17, %19 : vector<128x64xf32>
    %cst_18 = arith.constant dense<0.000000e+00> : vector<128xf32>
    %21 = vector.multi_reduction <add>, %20, %cst_18 [1] : vector<128x64xf32> to vector<128xf32>
    %22 = vector.shape_cast %21 : vector<128xf32> to vector<128x1xf32>
    %c0_19 = arith.constant 0 : index
    %c0_20 = arith.constant 0 : index
    %23 = memref.load %arg7[%c0_19, %c0_20] : memref<1x1xf32, #tpu.memory_space<smem>>
    %24 = vector.broadcast %23 : f32 to vector<128x1xf32>
    %25 = arith.addf %22, %24 : vector<128x1xf32>
    %26 = arith.negf %25 : vector<128x1xf32>
    %27 = math.exp %26 : vector<128x1xf32>
    %cst_21 = arith.constant 1.000000e+00 : f32
    %28 = vector.broadcast %cst_21 : f32 to vector<128x1xf32>
    %29 = arith.addf %28, %27 : vector<128x1xf32>
    %30 = arith.divf %28, %29 : vector<128x1xf32>
    %c0_22 = arith.constant 0 : index
    %c0_23 = arith.constant 0 : index
    %31 = vector.load %arg8[%c0_22, %c0_23] : memref<128x1xf32, #tpu.memory_space<vmem>>, vector<128x1xf32>
    tpu.vector_store %arg8[%c0_22, %c0_23], %30 {strides = array<i32>} : memref<128x1xf32, #tpu.memory_space<vmem>>, vector<128x1xf32>,
    return
  }
  func.func @transform_0(%arg0: i32) -> (i32, i32) {
    %c0_i32 = arith.constant 0 : i32
    %c0_i32_0 = arith.constant 0 : i32
    return %arg0, %c0_i32 : i32, i32
  }
  func.func @transform_1(%arg0: i32) -> (i32, i32) {
    %c0_i32 = arith.constant 0 : i32
    %c0_i32_0 = arith.constant 0 : i32
    %c0_i32_1 = arith.constant 0 : i32
    return %c0_i32, %c0_i32_0 : i32, i32
  }
  func.func @transform_2(%arg0: i32) -> (i32, i32) {
    %c0_i32 = arith.constant 0 : i32
    %c0_i32_0 = arith.constant 0 : i32
    %c0_i32_1 = arith.constant 0 : i32
    return %c0_i32, %c0_i32_0 : i32, i32
  }
  func.func @transform_3(%arg0: i32) -> (i32, i32) {
    %c0_i32 = arith.constant 0 : i32
    %c0_i32_0 = arith.constant 0 : i32
    %c0_i32_1 = arith.constant 0 : i32
    return %c0_i32, %c0_i32_0 : i32, i32
  }
  func.func @transform_4(%arg0: i32) -> (i32, i32) {
    %c0_i32 = arith.constant 0 : i32
    %c0_i32_0 = arith.constant 0 : i32
    %c0_i32_1 = arith.constant 0 : i32
    return %c0_i32, %c0_i32_0 : i32, i32
  }
  func.func @transform_5(%arg0: i32) -> (i32, i32) {
    %c0_i32 = arith.constant 0 : i32
    %c0_i32_0 = arith.constant 0 : i32
    %c0_i32_1 = arith.constant 0 : i32
    return %c0_i32, %c0_i32_0 : i32, i32
  }
  func.func @transform_6(%arg0: i32) -> (i32, i32) {
    %c0_i32 = arith.constant 0 : i32
    %c0_i32_0 = arith.constant 0 : i32
    %c0_i32_1 = arith.constant 0 : i32
    return %c0_i32, %c0_i32_0 : i32, i32
  }
  func.func @transform_7(%arg0: i32) -> (i32, i32) {
    %c0_i32 = arith.constant 0 : i32
    %c0_i32_0 = arith.constant 0 : i32
    return %arg0, %c0_i32 : i32, i32
  }
}

</mosaic_0001>

<llo_original>
// kernel: tpu_custom_call.1
$region0: #{tpu_custom_call.1}
  #allocation0 [shape = 'u32[]', space=smem, size = 0x4, offset = 0x4, fixed_abs, tag = 'smem constant byte address 0x4 - core index']
  #allocation1 [shape = 'u32[72,128]{1,0:T(1,128)}', space=vmem, size = 0x9000, scoped, tag = 'internal scratch']
  #allocation2 [shape = 'bf16[128,64]{1,0:T(8,128)(2,1)}', space=vmem, size = 0x8000, scoped, tag = 'scratch operand']
  #allocation3 [shape = 'f32[1,1]{1,0:T(1,128)S(6)}', space=smem, size = 0x200, scoped, tag = 'scoped memory for tpu_custom_call.1']
  %s0 = inlined_call_operand.vmem [shape: bf16[256,64], index: 0, kind: input, shape index: {}]
  %s1 = inlined_call_operand.vmem [shape: bf16[64,64], index: 1, kind: input, shape index: {}]
  %s2 = inlined_call_operand.vmem [shape: f32[1,64], index: 2, kind: input, shape index: {}]
  %s3 = inlined_call_operand.vmem [shape: bf16[64,64], index: 3, kind: input, shape index: {}]
  %s4 = inlined_call_operand.vmem [shape: f32[1,64], index: 4, kind: input, shape index: {}]
  %s5 = inlined_call_operand.vmem [shape: f32[1,64], index: 5, kind: input, shape index: {}]
  %s6 = inlined_call_operand.<no memory space> [shape: f32[1,1], index: 6, kind: input, shape index: {}]
  %s7 = inlined_call_operand.vmem [shape: f32[256,1], index: 7, kind: output, shape index: {}]
  %s8 = sld [smem:[#allocation0]]
  $region61: #{tpu_custom_call.1} parent=0
    _
  %s10 = ssub.s32 1, %s8
  %s11 = scalar_select 0, %s10, %s8
  %12 = sst [smem:[#allocation3]] %s6
  loop: start=0, step=1, limit=4
  $region2: #{tpu_custom_call.1} parent=0 // loop_pre_header
    _
  $region3: #{tpu_custom_call.1} parent=0 // loop_header
    %s14 = sphi 0, %s18
    %p15 = scmp.ge.s32.totalorder %s14, 4
    %s24 = sphi 0, %s26
    %s27 = sphi 0, %s24
    %s28 = sphi 0, %s27
    %s44 = sphi 0, %s28
    %s48 = sphi 0, %s48
    %s50 = sphi 0, %s48
    %s51 = sphi 0, %s50
    %s65 = sphi 0, %s51
    %s69 = sphi 0, %s69
    %s71 = sphi 0, %s69
    %s72 = sphi 0, %s71
    %s86 = sphi 0, %s72
    %s90 = sphi 0, %s90
    %s92 = sphi 0, %s90
    %s93 = sphi 0, %s92
    %s107 = sphi 0, %s93
    %s111 = sphi 0, %s111
    %s113 = sphi 0, %s111
    %s114 = sphi 0, %s113
    %s128 = sphi 0, %s114
    %s132 = sphi 0, %s132
    %s134 = sphi 0, %s132
    %s135 = sphi 0, %s134
    %s149 = sphi 0, %s135
    %s153 = sphi 0, %s153
    %s155 = sphi 0, %s153
    %s156 = sphi 0, %s155
    %s170 = sphi 0, %s156
    %s176 = sphi 0, %s178
    %s179 = sphi 0, %s176
    %s180 = sphi 0, %s179
    %s196 = sphi 0, %s180
  $region4: #{tpu_custom_call.1} parent=0 // loop_header_branch
    %17 = sbr.rel (%p15) target = $region8
  $region5: #{tpu_custom_call.1} parent=0 // loop_body
    %s19 = ssub.s32 %s14, 1
    %s20 = ssub.s32 %s14, 2
    %s21 = sadd.s32 %s14, 1
    %s22 = ssub.s32 %s14, %s21
    %p23 = scmp.eq.s32.totalorder %s22, 0
    %s25 = sadd.s32 %s24, 1
    %s26 = scalar_select %p23, %s24, %s25
    %p29 = pneg %p23
    %p30 = scmp.eq.s32.totalorder %s14, 1
    %p31 = por %p29, %p30
    %p32 = scmp.ne.s32.totalorder %s24, %s27
    %p33 = scmp.eq.s32.totalorder %s14, 0
    %p34 = por %p32, %p33
    %p35 = scmp.ne.s32.totalorder %s24, %s27
    %p36 = scmp.eq.s32.totalorder %s19, 1
    %p37 = por %p35, %p36
    %p38 = scmp.ne.s32.totalorder %s27, %s28
    %p39 = scmp.eq.s32.totalorder %s19, 0
    %p40 = por %p38, %p39
    %p41 = scmp.ne.s32.totalorder %s27, %s28
    %p42 = scmp.eq.s32.totalorder %s20, 1
    %p43 = por %p41, %p42
    %p45 = scmp.ne.s32.totalorder %s28, %s44
    %p46 = scmp.eq.s32.totalorder %s20, 0
    %p47 = por %p45, %p46
    %s49 = sadd.s32 %s48, 1
    %p52 = scmp.eq.s32.totalorder %s14, 1
    %p53 = scmp.ne.s32.totalorder %s48, %s50
    %p54 = scmp.eq.s32.totalorder %s14, 0
    %p55 = por %p53, %p54
    %p56 = scmp.ne.s32.totalorder %s48, %s50
    %p57 = scmp.eq.s32.totalorder %s19, 1
    %p58 = por %p56, %p57
    %p59 = scmp.ne.s32.totalorder %s50, %s51
    %p60 = scmp.eq.s32.totalorder %s19, 0
    %p61 = por %p59, %p60
    %p62 = scmp.ne.s32.totalorder %s50, %s51
    %p63 = scmp.eq.s32.totalorder %s20, 1
    %p64 = por %p62, %p63
    %p66 = scmp.ne.s32.totalorder %s51, %s65
    %p67 = scmp.eq.s32.totalorder %s20, 0
    %p68 = por %p66, %p67
    %s70 = sadd.s32 %s69, 1
    %p73 = scmp.eq.s32.totalorder %s14, 1
    %p74 = scmp.ne.s32.totalorder %s69, %s71
    %p75 = scmp.eq.s32.totalorder %s14, 0
    %p76 = por %p74, %p75
    %p77 = scmp.ne.s32.totalorder %s69, %s71
    %p78 = scmp.eq.s32.totalorder %s19, 1
    %p79 = por %p77, %p78
    %p80 = scmp.ne.s32.totalorder %s71, %s72
    %p81 = scmp.eq.s32.totalorder %s19, 0
    %p82 = por %p80, %p81
    %p83 = scmp.ne.s32.totalorder %s71, %s72
    %p84 = scmp.eq.s32.totalorder %s20, 1
    %p85 = por %p83, %p84
    %p87 = scmp.ne.s32.totalorder %s72, %s86
    %p88 = scmp.eq.s32.totalorder %s20, 0
    %p89 = por %p87, %p88
    %s91 = sadd.s32 %s90, 1
    %p94 = scmp.eq.s32.totalorder %s14, 1
    %p95 = scmp.ne.s32.totalorder %s90, %s92
    %p96 = scmp.eq.s32.totalorder %s14, 0
    %p97 = por %p95, %p96
    %p98 = scmp.ne.s32.totalorder %s90, %s92
    %p99 = scmp.eq.s32.totalorder %s19, 1
    %p100 = por %p98, %p99
    %p101 = scmp.ne.s32.totalorder %s92, %s93
    %p102 = scmp.eq.s32.totalorder %s19, 0
    %p103 = por %p101, %p102
    %p104 = scmp.ne.s32.totalorder %s92, %s93
    %p105 = scmp.eq.s32.totalorder %s20, 1
    %p106 = por %p104, %p105
    %p108 = scmp.ne.s32.totalorder %s93, %s107
    %p109 = scmp.eq.s32.totalorder %s20, 0
    %p110 = por %p108, %p109
    %s112 = sadd.s32 %s111, 1
    %p115 = scmp.eq.s32.totalorder %s14, 1
    %p116 = scmp.ne.s32.totalorder %s111, %s113
    %p117 = scmp.eq.s32.totalorder %s14, 0
    %p118 = por %p116, %p117
    %p119 = scmp.ne.s32.totalorder %s111, %s113
    %p120 = scmp.eq.s32.totalorder %s19, 1
    %p121 = por %p119, %p120
    %p122 = scmp.ne.s32.totalorder %s113, %s114
    %p123 = scmp.eq.s32.totalorder %s19, 0
    %p124 = por %p122, %p123
    %p125 = scmp.ne.s32.totalorder %s113, %s114
    %p126 = scmp.eq.s32.totalorder %s20, 1
    %p127 = por %p125, %p126
    %p129 = scmp.ne.s32.totalorder %s114, %s128
    %p130 = scmp.eq.s32.totalorder %s20, 0
    %p131 = por %p129, %p130
    %s133 = sadd.s32 %s132, 1
    %p136 = scmp.eq.s32.totalorder %s14, 1
    %p137 = scmp.ne.s32.totalorder %s132, %s134
    %p138 = scmp.eq.s32.totalorder %s14, 0
    %p139 = por %p137, %p138
    %p140 = scmp.ne.s32.totalorder %s132, %s134
    %p141 = scmp.eq.s32.totalorder %s19, 1
    %p142 = por %p140, %p141
    %p143 = scmp.ne.s32.totalorder %s134, %s135
    %p144 = scmp.eq.s32.totalorder %s19, 0
    %p145 = por %p143, %p144
    %p146 = scmp.ne.s32.totalorder %s134, %s135
    %p147 = scmp.eq.s32.totalorder %s20, 1
    %p148 = por %p146, %p147
    %p150 = scmp.ne.s32.totalorder %s135, %s149
    %p151 = scmp.eq.s32.totalorder %s20, 0
    %p152 = por %p150, %p151
    %s154 = sadd.s32 %s153, 1
    %p157 = scmp.eq.s32.totalorder %s14, 1
    %p158 = scmp.ne.s32.totalorder %s153, %s155
    %p159 = scmp.eq.s32.totalorder %s14, 0
    %p160 = por %p158, %p159
    %p161 = scmp.ne.s32.totalorder %s153, %s155
    %p162 = scmp.eq.s32.totalorder %s19, 1
    %p163 = por %p161, %p162
    %p164 = scmp.ne.s32.totalorder %s155, %s156
    %p165 = scmp.eq.s32.totalorder %s19, 0
    %p166 = por %p164, %p165
    %p167 = scmp.ne.s32.totalorder %s155, %s156
    %p168 = scmp.eq.s32.totalorder %s20, 1
    %p169 = por %p167, %p168
    %p171 = scmp.ne.s32.totalorder %s156, %s170
    %p172 = scmp.eq.s32.totalorder %s20, 0
    %p173 = por %p171, %p172
    %s174 = ssub.s32 %s14, %s21
    %p175 = scmp.eq.s32.totalorder %s174, 0
    %s177 = sadd.s32 %s176, 1
    %s178 = scalar_select %p175, %s176, %s177
    %p181 = pneg %p175
    %p182 = scmp.eq.s32.totalorder %s14, 1
    %p183 = por %p181, %p182
    %p184 = scmp.ne.s32.totalorder %s176, %s179
    %p185 = scmp.eq.s32.totalorder %s14, 0
    %p186 = por %p184, %p185
    %p187 = scmp.ne.s32.totalorder %s176, %s179
    %p188 = scmp.eq.s32.totalorder %s19, 1
    %p189 = por %p187, %p188
    %p190 = scmp.ne.s32.totalorder %s179, %s180
    %p191 = scmp.eq.s32.totalorder %s19, 0
    %p192 = por %p190, %p191
    %p193 = scmp.ne.s32.totalorder %s179, %s180
    %p194 = scmp.eq.s32.totalorder %s20, 1
    %p195 = por %p193, %p194
    %p197 = scmp.ne.s32.totalorder %s180, %s196
    %p198 = scmp.eq.s32.totalorder %s20, 0
    %p199 = por %p197, %p198
    %p200 = scmp.le.s32.totalorder 1, %s14
    %p201 = scmp.lt.s32.totalorder %s14, 3
    %p202 = pnand %p200, %p201
    %p203 = pneg %p202
    // Predicated region
    $region9: #{tpu_custom_call.1} parent=5 // pred_check
      _
    $region10: #{tpu_custom_call.1} parent=5 // pred_check_branch
      %205 = sbr.rel (%p202) target = $region12
    $region11: #{tpu_custom_call.1} parent=5 // pred_region
      %s206 = ssub.s32 %s14, 1
      // Predicated region
      $region13: #{tpu_custom_call.1} parent=11 // pred_check
        %p207 = pneg %p61
      $region14: #{tpu_custom_call.1} parent=11 // pred_check_branch
        %209 = sbr.rel (%p207) target = $region16
      $region15: #{tpu_custom_call.1} parent=11 // pred_region
        _
      $region16: #{tpu_custom_call.1} parent=11 // pred_fallthru
        _
      // Predicated region
      $region17: #{tpu_custom_call.1} parent=11 // pred_check
        %p210 = pneg %p82
      $region18: #{tpu_custom_call.1} parent=11 // pred_check_branch
        %212 = sbr.rel (%p210) target = $region20
      $region19: #{tpu_custom_call.1} parent=11 // pred_region
        _
      $region20: #{tpu_custom_call.1} parent=11 // pred_fallthru
        _
      // Predicated region
      $region21: #{tpu_custom_call.1} parent=11 // pred_check
        %p213 = pneg %p103
      $region22: #{tpu_custom_call.1} parent=11 // pred_check_branch
        %215 = sbr.rel (%p213) target = $region24
      $region23: #{tpu_custom_call.1} parent=11 // pred_region
        _
      $region24: #{tpu_custom_call.1} parent=11 // pred_fallthru
        _
      // Predicated region
      $region25: #{tpu_custom_call.1} parent=11 // pred_check
        %p216 = pneg %p124
      $region26: #{tpu_custom_call.1} parent=11 // pred_check_branch
        %218 = sbr.rel (%p216) target = $region28
      $region27: #{tpu_custom_call.1} parent=11 // pred_region
        _
      $region28: #{tpu_custom_call.1} parent=11 // pred_fallthru
        _
      // Predicated region
      $region29: #{tpu_custom_call.1} parent=11 // pred_check
        %p219 = pneg %p145
      $region30: #{tpu_custom_call.1} parent=11 // pred_check_branch
        %221 = sbr.rel (%p219) target = $region32
      $region31: #{tpu_custom_call.1} parent=11 // pred_region
        _
      $region32: #{tpu_custom_call.1} parent=11 // pred_fallthru
        _
      // Predicated region
      $region33: #{tpu_custom_call.1} parent=11 // pred_check
        %p222 = pneg %p166
      $region34: #{tpu_custom_call.1} parent=11 // pred_check_branch
        %224 = sbr.rel (%p222) target = $region36
      $region35: #{tpu_custom_call.1} parent=11 // pred_region
        _
      $region36: #{tpu_custom_call.1} parent=11 // pred_fallthru
        _
    $region12: #{tpu_custom_call.1} parent=5 // pred_fallthru
      _
    %p225 = scmp.lt.s32.totalorder %s14, 2
    // Predicated region
    $region37: #{tpu_custom_call.1} parent=5 // pred_check
      %p226 = pneg %p225
    $region38: #{tpu_custom_call.1} parent=5 // pred_check_branch
      %228 = sbr.rel (%p226) target = $region40
    $region39: #{tpu_custom_call.1} parent=5 // pred_region
      // Predicated region
      $region41: #{tpu_custom_call.1} parent=39 // pred_check
        %p229 = pneg %p34
      $region42: #{tpu_custom_call.1} parent=39 // pred_check_branch
        %231 = sbr.rel (%p229) target = $region44
      $region43: #{tpu_custom_call.1} parent=39 // pred_region
        %s232 = smul.u32 16, %s14
        %p233 = scmp.lt.s32.totalorder %s232, 31
        %s234 = scalar_select %p233, %s232, 31
        %s235 = smul.addr %s234, 4
        %s236 = scalar_lea.vmem %s0, %s235
        %s237 = smul.u32 16, %s14
      $region44: #{tpu_custom_call.1} parent=39 // pred_fallthru
        _
    $region40: #{tpu_custom_call.1} parent=5 // pred_fallthru
      _
    %p238 = scmp.le.s32.totalorder 1, %s14
    %p239 = scmp.lt.s32.totalorder %s14, 3
    %p240 = pnand %p238, %p239
    %p241 = pneg %p240
    // Predicated region
    $region45: #{tpu_custom_call.1} parent=5 // pred_check
      _
    $region46: #{tpu_custom_call.1} parent=5 // pred_check_branch
      %243 = sbr.rel (%p240) target = $region48
    $region47: #{tpu_custom_call.1} parent=5 // pred_region
      %s244 = ssub.s32 %s14, 1
      %s245 = smul.u32 16, %s19
      %p246 = scmp.lt.s32.totalorder %s245, 31
      %s247 = scalar_select %p246, %s245, 31
      %s248 = smul.addr %s247, 4
      %s249 = scalar_lea.vmem %s0, %s248
      %p250 = pneg %p40
      %p251 = pneg %p37
      %p252 = pneg %p61
      %p253 = pneg %p58
      %p254 = pneg %p82
      %p255 = pneg %p79
      %p256 = pneg %p103
      %p257 = pneg %p100
      %p258 = pneg %p124
      %p259 = pneg %p121
      %p260 = pneg %p145
      %p261 = pneg %p142
      %p262 = pneg %p166
      %p263 = pneg %p163
      %p264 = pneg %p192
      %p265 = pneg %p189
      %s266 = smul.u32 16, %s19
      %p267 = scmp.lt.s32.totalorder %s266, 31
      %s268 = scalar_select %p267, %s266, 31
      %s269 = smul.addr %s268, 8
      %s270 = scalar_lea.vmem %s7, %s269
      %s271 = smul.u32 16, %s19
      %p272 = scmp.lt.s32.totalorder %s271, 31
      %s273 = scalar_select %p272, %s271, 31
      %s274 = smul.addr %s273, 4
      %s275 = scalar_lea.vmem %s0, %s274
      %s276 = smul.u32 16, %s19
      %s277 = smul.u32 16, %s19
      %p278 = scmp.lt.s32.totalorder %s277, 31
      %s279 = scalar_select %p278, %s277, 31
      %s280 = smul.addr %s279, 8
      %s281 = scalar_lea.vmem %s7, %s280
      %s282 = smul.u32 16, %s19
      %v284 = vld [vmem:[%s275] sm:$0xf]
      %v285 = vld [vmem:[%s275 + $0x4] sm:$0xf]
      %v286 = vld [vmem:[%s275 + $0x8] sm:$0xf]
      %v287 = vld [vmem:[%s275 + $0xc] sm:$0xf]
      %v288 = vld [vmem:[%s275 + $0x10] sm:$0xf]
      %v289 = vld [vmem:[%s275 + $0x14] sm:$0xf]
      %v290 = vld [vmem:[%s275 + $0x18] sm:$0xf]
      %v291 = vld [vmem:[%s275 + $0x1c] sm:$0xf]
      %v292 = vld [vmem:[%s275 + $0x20] sm:$0xf]
      %v293 = vld [vmem:[%s275 + $0x24] sm:$0xf]
      %v294 = vld [vmem:[%s275 + $0x28] sm:$0xf]
      %v295 = vld [vmem:[%s275 + $0x2c] sm:$0xf]
      %v296 = vld [vmem:[%s275 + $0x30] sm:$0xf]
      %v297 = vld [vmem:[%s275 + $0x34] sm:$0xf]
      %v298 = vld [vmem:[%s275 + $0x38] sm:$0xf]
      %v299 = vld [vmem:[%s275 + $0x3c] sm:$0xf]
      %v300 = vld [vmem:[%s1] sm:$0xf]
      %v301 = vld [vmem:[%s1 + $0x4] sm:$0xf]
      %v302 = vld [vmem:[%s1 + $0x8] sm:$0xf]
      %v303 = vld [vmem:[%s1 + $0xc] sm:$0xf]
      %v304 = vld [vmem:[%s1 + $0x10] sm:$0xf]
      %v305 = vld [vmem:[%s1 + $0x14] sm:$0xf]
      %v306 = vld [vmem:[%s1 + $0x18] sm:$0xf]
      %v307 = vld [vmem:[%s1 + $0x1c] sm:$0xf]
      %v308 = vld [vmem:[%s2] sm:$0x1]
      %v310 = vperm.slane %v308, 0
      %v328 = vunpack.c.l.b16 %v284
      %v329 = vunpack.c.l.b16 %v285
      %v330 = vunpack.c.l.b16 %v286
      %v331 = vunpack.c.l.b16 %v287
      %v332 = vunpack.c.l.b16 %v288
      %v333 = vunpack.c.l.b16 %v289
      %v334 = vunpack.c.l.b16 %v290
      %v335 = vunpack.c.l.b16 %v291
      %v336 = vunpack.c.l.b16 %v292
      %v337 = vunpack.c.l.b16 %v293
      %v338 = vunpack.c.l.b16 %v294
      %v339 = vunpack.c.l.b16 %v295
      %v340 = vunpack.c.l.b16 %v296
      %v341 = vunpack.c.l.b16 %v297
      %v342 = vunpack.c.l.b16 %v298
      %v343 = vunpack.c.l.b16 %v299
      %v344 = vpack.c.b16 %v329, %v328
      %v345 = vpack.c.b16 %v331, %v330
      %v346 = vpack.c.b16 %v333, %v332
      %v347 = vpack.c.b16 %v335, %v334
      %v348 = vpack.c.b16 %v337, %v336
      %v349 = vpack.c.b16 %v339, %v338
      %v350 = vpack.c.b16 %v341, %v340
      %v351 = vpack.c.b16 %v343, %v342
      %v360 = vunpack.c.l.b16 %v300
      %v361 = vunpack.c.l.b16 %v301
      %v362 = vunpack.c.l.b16 %v302
      %v363 = vunpack.c.l.b16 %v303
      %v364 = vunpack.c.l.b16 %v304
      %v365 = vunpack.c.l.b16 %v305
      %v366 = vunpack.c.l.b16 %v306
      %v367 = vunpack.c.l.b16 %v307
      %v368 = vpack.c.b16 %v361, %v360
      %v369 = vpack.c.b16 %v363, %v362
      %v370 = vpack.c.b16 %v365, %v364
      %v371 = vpack.c.b16 %v367, %v366
      %vm376 = vcmask 523264
      %v378 = vsel %vm376, %v344, 0
      %v381 = vsel %vm376, %v345, 0
      %v384 = vsel %vm376, %v346, 0
      %v387 = vsel %vm376, %v347, 0
      %v390 = vsel %vm376, %v348, 0
      %v393 = vsel %vm376, %v349, 0
      %v396 = vsel %vm376, %v350, 0
      %v399 = vsel %vm376, %v351, 0
      %401 = vmatpush.bf16.msra.mxu0 0
      %402 = vmatpush.bf16.msra.mxu0 0
      %403 = vmatpush.bf16.msra.mxu0 0
      %404 = vmatpush.bf16.msra.mxu0 0
      %405 = vmatpush.bf16.msra.mxu0 %v371
      %406 = vmatpush.bf16.msra.mxu0 %v370
      %407 = vmatpush.bf16.msra.mxu0 %v369
      %408 = vmatpush.bf16.msra.mxu0 %v368
      %409 = vmatmul.bf16.gmra.mxu0 %v378
      %v410 = vpop.f32.mrf.mxu0
      %v411 = vadd.f32 %v310, %v410
      %v412 = vpop.f32.mrf.mxu0
      %v413 = vadd.f32 %v310, %v412
      %414 = vmatmul.bf16.gmra.mxu0 %v381
      %v415 = vpop.f32.mrf.mxu0
      %v416 = vadd.f32 %v310, %v415
      %v417 = vpop.f32.mrf.mxu0
      %v418 = vadd.f32 %v310, %v417
      %419 = vmatmul.bf16.gmra.mxu0 %v384
      %v420 = vpop.f32.mrf.mxu0
      %v421 = vadd.f32 %v310, %v420
      %v422 = vpop.f32.mrf.mxu0
      %v423 = vadd.f32 %v310, %v422
      %424 = vmatmul.bf16.gmra.mxu0 %v387
      %v425 = vpop.f32.mrf.mxu0
      %v426 = vadd.f32 %v310, %v425
      %v427 = vpop.f32.mrf.mxu0
      %v428 = vadd.f32 %v310, %v427
      %429 = vmatmul.bf16.gmra.mxu0 %v390
      %v430 = vpop.f32.mrf.mxu0
      %v431 = vadd.f32 %v310, %v430
      %v432 = vpop.f32.mrf.mxu0
      %v433 = vadd.f32 %v310, %v432
      %434 = vmatmul.bf16.gmra.mxu0 %v393
      %v435 = vpop.f32.mrf.mxu0
      %v436 = vadd.f32 %v310, %v435
      %v437 = vpop.f32.mrf.mxu0
      %v438 = vadd.f32 %v310, %v437
      %439 = vmatmul.bf16.gmra.mxu0 %v396
      %v440 = vpop.f32.mrf.mxu0
      %v441 = vadd.f32 %v310, %v440
      %v442 = vpop.f32.mrf.mxu0
      %v443 = vadd.f32 %v310, %v442
      %444 = vmatmul.bf16.gmra.mxu0 %v399
      %v445 = vpop.f32.mrf.mxu0
      %v446 = vadd.f32 %v310, %v445
      %v447 = vpop.f32.mrf.mxu0
      %v448 = vadd.f32 %v310, %v447
      %449 = vdwg.mxu0
      %v450 = vmax.f32 %v411, 0.0
      %v451 = vmax.f32 %v413, 0.0
      %v452 = vmax.f32 %v416, 0.0
      %v453 = vmax.f32 %v418, 0.0
      %v454 = vmax.f32 %v421, 0.0
      %v455 = vmax.f32 %v423, 0.0
      %v456 = vmax.f32 %v426, 0.0
      %v457 = vmax.f32 %v428, 0.0
      %v458 = vmax.f32 %v431, 0.0
      %v459 = vmax.f32 %v433, 0.0
      %v460 = vmax.f32 %v436, 0.0
      %v461 = vmax.f32 %v438, 0.0
      %v462 = vmax.f32 %v441, 0.0
      %v463 = vmax.f32 %v443, 0.0
      %v464 = vmax.f32 %v446, 0.0
      %v465 = vmax.f32 %v448, 0.0
      %v466 = vpack.c.bf16 %v450, %v450
      %v467 = vpack.c.bf16 %v451, %v451
      %v468 = vpack.c.bf16 %v452, %v452
      %v469 = vpack.c.bf16 %v453, %v453
      %v470 = vpack.c.bf16 %v454, %v454
      %v471 = vpack.c.bf16 %v455, %v455
      %v472 = vpack.c.bf16 %v456, %v456
      %v473 = vpack.c.bf16 %v457, %v457
      %v474 = vpack.c.bf16 %v458, %v458
      %v475 = vpack.c.bf16 %v459, %v459
      %v476 = vpack.c.bf16 %v460, %v460
      %v477 = vpack.c.bf16 %v461, %v461
      %v478 = vpack.c.bf16 %v462, %v462
      %v479 = vpack.c.bf16 %v463, %v463
      %v480 = vpack.c.bf16 %v464, %v464
      %v481 = vpack.c.bf16 %v465, %v465
      %vm482 = vcmask 519168
      %483 = vst.msk [vmem:[#allocation2] sm:$0xf] %vm482, %v466
      %484 = vst.msk [vmem:[#allocation2 + $0x4] sm:$0xf] %vm482, %v467
      %485 = vst.msk [vmem:[#allocation2 + $0x8] sm:$0xf] %vm482, %v468
      %486 = vst.msk [vmem:[#allocation2 + $0xc] sm:$0xf] %vm482, %v469
      %487 = vst.msk [vmem:[#allocation2 + $0x10] sm:$0xf] %vm482, %v470
      %488 = vst.msk [vmem:[#allocation2 + $0x14] sm:$0xf] %vm482, %v471
      %489 = vst.msk [vmem:[#allocation2 + $0x18] sm:$0xf] %vm482, %v472
      %490 = vst.msk [vmem:[#allocation2 + $0x1c] sm:$0xf] %vm482, %v473
      %491 = vst.msk [vmem:[#allocation2 + $0x20] sm:$0xf] %vm482, %v474
      %492 = vst.msk [vmem:[#allocation2 + $0x24] sm:$0xf] %vm482, %v475
      %493 = vst.msk [vmem:[#allocation2 + $0x28] sm:$0xf] %vm482, %v476
      %494 = vst.msk [vmem:[#allocation2 + $0x2c] sm:$0xf] %vm482, %v477
      %495 = vst.msk [vmem:[#allocation2 + $0x30] sm:$0xf] %vm482, %v478
      %496 = vst.msk [vmem:[#allocation2 + $0x34] sm:$0xf] %vm482, %v479
      %497 = vst.msk [vmem:[#allocation2 + $0x38] sm:$0xf] %vm482, %v480
      %498 = vst.msk [vmem:[#allocation2 + $0x3c] sm:$0xf] %vm482, %v481
      %v499 = vld [vmem:[#allocation2] sm:$0xf]
      %v500 = vld [vmem:[#allocation2 + $0x4] sm:$0xf]
      %v501 = vld [vmem:[#allocation2 + $0x8] sm:$0xf]
      %v502 = vld [vmem:[#allocation2 + $0xc] sm:$0xf]
      %v503 = vld [vmem:[#allocation2 + $0x10] sm:$0xf]
      %v504 = vld [vmem:[#allocation2 + $0x14] sm:$0xf]
      %v505 = vld [vmem:[#allocation2 + $0x18] sm:$0xf]
      %v506 = vld [vmem:[#allocation2 + $0x1c] sm:$0xf]
      %v507 = vld [vmem:[#allocation2 + $0x20] sm:$0xf]
      %v508 = vld [vmem:[#allocation2 + $0x24] sm:$0xf]
      %v509 = vld [vmem:[#allocation2 + $0x28] sm:$0xf]
      %v510 = vld [vmem:[#allocation2 + $0x2c] sm:$0xf]
      %v511 = vld [vmem:[#allocation2 + $0x30] sm:$0xf]
      %v512 = vld [vmem:[#allocation2 + $0x34] sm:$0xf]
      %v513 = vld [vmem:[#allocation2 + $0x38] sm:$0xf]
      %v514 = vld [vmem:[#allocation2 + $0x3c] sm:$0xf]
      %v515 = vld [vmem:[%s3] sm:$0xf]
      %v516 = vld [vmem:[%s3 + $0x4] sm:$0xf]
      %v517 = vld [vmem:[%s3 + $0x8] sm:$0xf]
      %v518 = vld [vmem:[%s3 + $0xc] sm:$0xf]
      %v519 = vld [vmem:[%s3 + $0x10] sm:$0xf]
      %v520 = vld [vmem:[%s3 + $0x14] sm:$0xf]
      %v521 = vld [vmem:[%s3 + $0x18] sm:$0xf]
      %v522 = vld [vmem:[%s3 + $0x1c] sm:$0xf]
      %v523 = vld [vmem:[%s4] sm:$0x1]
      %v525 = vperm.slane %v523, 0
      %v543 = vunpack.c.l.b16 %v499
      %v544 = vunpack.c.l.b16 %v500
      %v545 = vunpack.c.l.b16 %v501
      %v546 = vunpack.c.l.b16 %v502
      %v547 = vunpack.c.l.b16 %v503
      %v548 = vunpack.c.l.b16 %v504
      %v549 = vunpack.c.l.b16 %v505
      %v550 = vunpack.c.l.b16 %v506
      %v551 = vunpack.c.l.b16 %v507
      %v552 = vunpack.c.l.b16 %v508
      %v553 = vunpack.c.l.b16 %v509
      %v554 = vunpack.c.l.b16 %v510
      %v555 = vunpack.c.l.b16 %v511
      %v556 = vunpack.c.l.b16 %v512
      %v557 = vunpack.c.l.b16 %v513
      %v558 = vunpack.c.l.b16 %v514
      %v559 = vpack.c.b16 %v544, %v543
      %v560 = vpack.c.b16 %v546, %v545
      %v561 = vpack.c.b16 %v548, %v547
      %v562 = vpack.c.b16 %v550, %v549
      %v563 = vpack.c.b16 %v552, %v551
      %v564 = vpack.c.b16 %v554, %v553
      %v565 = vpack.c.b16 %v556, %v555
      %v566 = vpack.c.b16 %v558, %v557
      %v575 = vunpack.c.l.b16 %v515
      %v576 = vunpack.c.l.b16 %v516
      %v577 = vunpack.c.l.b16 %v517
      %v578 = vunpack.c.l.b16 %v518
      %v579 = vunpack.c.l.b16 %v519
      %v580 = vunpack.c.l.b16 %v520
      %v581 = vunpack.c.l.b16 %v521
      %v582 = vunpack.c.l.b16 %v522
      %v583 = vpack.c.b16 %v576, %v575
      %v584 = vpack.c.b16 %v578, %v577
      %v585 = vpack.c.b16 %v580, %v579
      %v586 = vpack.c.b16 %v582, %v581
      %v592 = vsel %vm376, %v559, 0
      %v595 = vsel %vm376, %v560, 0
      %v598 = vsel %vm376, %v561, 0
      %v601 = vsel %vm376, %v562, 0
      %v604 = vsel %vm376, %v563, 0
      %v607 = vsel %vm376, %v564, 0
      %v610 = vsel %vm376, %v565, 0
      %v613 = vsel %vm376, %v566, 0
      %615 = vmatpush.bf16.msra.mxu0 0
      %616 = vmatpush.bf16.msra.mxu0 0
      %617 = vmatpush.bf16.msra.mxu0 0
      %618 = vmatpush.bf16.msra.mxu0 0
      %619 = vmatpush.bf16.msra.mxu0 %v586
      %620 = vmatpush.bf16.msra.mxu0 %v585
      %621 = vmatpush.bf16.msra.mxu0 %v584
      %622 = vmatpush.bf16.msra.mxu0 %v583
      %623 = vmatmul.bf16.gmra.mxu0 %v592
      %v624 = vpop.f32.mrf.mxu0
      %v625 = vadd.f32 %v525, %v624
      %v626 = vpop.f32.mrf.mxu0
      %v627 = vadd.f32 %v525, %v626
      %628 = vmatmul.bf16.gmra.mxu0 %v595
      %v629 = vpop.f32.mrf.mxu0
      %v630 = vadd.f32 %v525, %v629
      %v631 = vpop.f32.mrf.mxu0
      %v632 = vadd.f32 %v525, %v631
      %633 = vmatmul.bf16.gmra.mxu0 %v598
      %v634 = vpop.f32.mrf.mxu0
      %v635 = vadd.f32 %v525, %v634
      %v636 = vpop.f32.mrf.mxu0
      %v637 = vadd.f32 %v525, %v636
      %638 = vmatmul.bf16.gmra.mxu0 %v601
      %v639 = vpop.f32.mrf.mxu0
      %v640 = vadd.f32 %v525, %v639
      %v641 = vpop.f32.mrf.mxu0
      %v642 = vadd.f32 %v525, %v641
      %643 = vmatmul.bf16.gmra.mxu0 %v604
      %v644 = vpop.f32.mrf.mxu0
      %v645 = vadd.f32 %v525, %v644
      %v646 = vpop.f32.mrf.mxu0
      %v647 = vadd.f32 %v525, %v646
      %648 = vmatmul.bf16.gmra.mxu0 %v607
      %v649 = vpop.f32.mrf.mxu0
      %v650 = vadd.f32 %v525, %v649
      %v651 = vpop.f32.mrf.mxu0
      %v652 = vadd.f32 %v525, %v651
      %653 = vmatmul.bf16.gmra.mxu0 %v610
      %v654 = vpop.f32.mrf.mxu0
      %v655 = vadd.f32 %v525, %v654
      %v656 = vpop.f32.mrf.mxu0
      %v657 = vadd.f32 %v525, %v656
      %658 = vmatmul.bf16.gmra.mxu0 %v613
      %v659 = vpop.f32.mrf.mxu0
      %v660 = vadd.f32 %v525, %v659
      %v661 = vpop.f32.mrf.mxu0
      %v662 = vadd.f32 %v525, %v661
      %663 = vdwg.mxu0
      %v664 = vmax.f32 %v625, 0.0
      %v665 = vmax.f32 %v627, 0.0
      %v666 = vmax.f32 %v630, 0.0
      %v667 = vmax.f32 %v632, 0.0
      %v668 = vmax.f32 %v635, 0.0
      %v669 = vmax.f32 %v637, 0.0
      %v670 = vmax.f32 %v640, 0.0
      %v671 = vmax.f32 %v642, 0.0
      %v672 = vmax.f32 %v645, 0.0
      %v673 = vmax.f32 %v647, 0.0
      %v674 = vmax.f32 %v650, 0.0
      %v675 = vmax.f32 %v652, 0.0
      %v676 = vmax.f32 %v655, 0.0
      %v677 = vmax.f32 %v657, 0.0
      %v678 = vmax.f32 %v660, 0.0
      %v679 = vmax.f32 %v662, 0.0
      %v680 = vld [vmem:[%s5] sm:$0x1]
      %v682 = vperm.slane %v680, 0
      %v684 = vmul.f32 %v664, %v682
      %v685 = vmul.f32 %v665, %v682
      %v686 = vmul.f32 %v666, %v682
      %v687 = vmul.f32 %v667, %v682
      %v688 = vmul.f32 %v668, %v682
      %v689 = vmul.f32 %v669, %v682
      %v690 = vmul.f32 %v670, %v682
      %v691 = vmul.f32 %v671, %v682
      %v692 = vmul.f32 %v672, %v682
      %v693 = vmul.f32 %v673, %v682
      %v694 = vmul.f32 %v674, %v682
      %v695 = vmul.f32 %v675, %v682
      %v696 = vmul.f32 %v676, %v682
      %v697 = vmul.f32 %v677, %v682
      %v698 = vmul.f32 %v678, %v682
      %v699 = vmul.f32 %v679, %v682
      %v700 = vsel %vm376, %v684, 0.0
      %701 = vadd.xlane.f32.xlu0 %v700
      %v702 = vpop.xlane.xlu0 %701
      %v703 = vsel %vm376, %v685, 0.0
      %704 = vadd.xlane.f32.xlu0 %v703
      %v705 = vpop.xlane.xlu0 %704
      %v706 = vsel %vm376, %v686, 0.0
      %707 = vadd.xlane.f32.xlu0 %v706
      %v708 = vpop.xlane.xlu0 %707
      %v709 = vsel %vm376, %v687, 0.0
      %710 = vadd.xlane.f32.xlu0 %v709
      %v711 = vpop.xlane.xlu0 %710
      %v712 = vsel %vm376, %v688, 0.0
      %713 = vadd.xlane.f32.xlu0 %v712
      %v714 = vpop.xlane.xlu0 %713
      %v715 = vsel %vm376, %v689, 0.0
      %716 = vadd.xlane.f32.xlu0 %v715
      %v717 = vpop.xlane.xlu0 %716
      %v718 = vsel %vm376, %v690, 0.0
      %719 = vadd.xlane.f32.xlu0 %v718
      %v720 = vpop.xlane.xlu0 %719
      %v721 = vsel %vm376, %v691, 0.0
      %722 = vadd.xlane.f32.xlu0 %v721
      %v723 = vpop.xlane.xlu0 %722
      %v724 = vsel %vm376, %v692, 0.0
      %725 = vadd.xlane.f32.xlu0 %v724
      %v726 = vpop.xlane.xlu0 %725
      %v727 = vsel %vm376, %v693, 0.0
      %728 = vadd.xlane.f32.xlu0 %v727
      %v729 = vpop.xlane.xlu0 %728
      %v730 = vsel %vm376, %v694, 0.0
      %731 = vadd.xlane.f32.xlu0 %v730
      %v732 = vpop.xlane.xlu0 %731
      %v733 = vsel %vm376, %v695, 0.0
      %734 = vadd.xlane.f32.xlu0 %v733
      %v735 = vpop.xlane.xlu0 %734
      %v736 = vsel %vm376, %v696, 0.0
      %737 = vadd.xlane.f32.xlu0 %v736
      %v738 = vpop.xlane.xlu0 %737
      %v739 = vsel %vm376, %v697, 0.0
      %740 = vadd.xlane.f32.xlu0 %v739
      %v741 = vpop.xlane.xlu0 %740
      %v742 = vsel %vm376, %v698, 0.0
      %743 = vadd.xlane.f32.xlu0 %v742
      %v744 = vpop.xlane.xlu0 %743
      %v745 = vsel %vm376, %v699, 0.0
      %746 = vadd.xlane.f32.xlu0 %v745
      %v747 = vpop.xlane.xlu0 %746
      %s748 = sld [smem:[#allocation3]]
      %v749 = vstv %s748
      %v750 = vadd.f32 %v702, %v749
      %v751 = vadd.f32 %v705, %v749
      %v752 = vadd.f32 %v708, %v749
      %v753 = vadd.f32 %v711, %v749
      %v754 = vadd.f32 %v714, %v749
      %v755 = vadd.f32 %v717, %v749
      %v756 = vadd.f32 %v720, %v749
      %v757 = vadd.f32 %v723, %v749
      %v758 = vadd.f32 %v726, %v749
      %v759 = vadd.f32 %v729, %v749
      %v760 = vadd.f32 %v732, %v749
      %v761 = vadd.f32 %v735, %v749
      %v762 = vadd.f32 %v738, %v749
      %v763 = vadd.f32 %v741, %v749
      %v764 = vadd.f32 %v744, %v749
      %v765 = vadd.f32 %v747, %v749
      %v766 = vxor.u32 %v750, 2147483648
      %v767 = vxor.u32 %v751, 2147483648
      %v768 = vxor.u32 %v752, 2147483648
      %v769 = vxor.u32 %v753, 2147483648
      %v770 = vxor.u32 %v754, 2147483648
      %v771 = vxor.u32 %v755, 2147483648
      %v772 = vxor.u32 %v756, 2147483648
      %v773 = vxor.u32 %v757, 2147483648
      %v774 = vxor.u32 %v758, 2147483648
      %v775 = vxor.u32 %v759, 2147483648
      %v776 = vxor.u32 %v760, 2147483648
      %v777 = vxor.u32 %v761, 2147483648
      %v778 = vxor.u32 %v762, 2147483648
      %v779 = vxor.u32 %v763, 2147483648
      %v780 = vxor.u32 %v764, 2147483648
      %v781 = vxor.u32 %v765, 2147483648
      %v782 = vmul.f32 %v766, 1.442695
      %v783 = vpow.pop %v782
      %v784 = vmul.f32 %v767, 1.442695
      %v785 = vpow.pop %v784
      %v786 = vmul.f32 %v768, 1.442695
      %v787 = vpow.pop %v786
      %v788 = vmul.f32 %v769, 1.442695
      %v789 = vpow.pop %v788
      %v790 = vmul.f32 %v770, 1.442695
      %v791 = vpow.pop %v790
      %v792 = vmul.f32 %v771, 1.442695
      %v793 = vpow.pop %v792
      %v794 = vmul.f32 %v772, 1.442695
      %v795 = vpow.pop %v794
      %v796 = vmul.f32 %v773, 1.442695
      %v797 = vpow.pop %v796
      %v798 = vmul.f32 %v774, 1.442695
      %v799 = vpow.pop %v798
      %v800 = vmul.f32 %v775, 1.442695
      %v801 = vpow.pop %v800
      %v802 = vmul.f32 %v776, 1.442695
      %v803 = vpow.pop %v802
      %v804 = vmul.f32 %v777, 1.442695
      %v805 = vpow.pop %v804
      %v806 = vmul.f32 %v778, 1.442695
      %v807 = vpow.pop %v806
      %v808 = vmul.f32 %v779, 1.442695
      %v809 = vpow.pop %v808
      %v810 = vmul.f32 %v780, 1.442695
      %v811 = vpow.pop %v810
      %v812 = vmul.f32 %v781, 1.442695
      %v813 = vpow.pop %v812
      %v814 = vadd.f32 %v783, 1.0
      %v815 = vadd.f32 %v785, 1.0
      %v816 = vadd.f32 %v787, 1.0
      %v817 = vadd.f32 %v789, 1.0
      %v818 = vadd.f32 %v791, 1.0
      %v819 = vadd.f32 %v793, 1.0
      %v820 = vadd.f32 %v795, 1.0
      %v821 = vadd.f32 %v797, 1.0
      %v822 = vadd.f32 %v799, 1.0
      %v823 = vadd.f32 %v801, 1.0
      %v824 = vadd.f32 %v803, 1.0
      %v825 = vadd.f32 %v805, 1.0
      %v826 = vadd.f32 %v807, 1.0
      %v827 = vadd.f32 %v809, 1.0
      %v828 = vadd.f32 %v811, 1.0
      %v829 = vadd.f32 %v813, 1.0
      %v830 = vrcp.pop %v814
      %v831 = vmul.f32 %v814, %v830
      %v832 = vsub.f32 1.0, %v831
      %v833 = vmul.f32 %v830, %v832
      %v834 = vadd.f32 %v830, %v833
      %vm835 = vweird.f32 %v814
      %vm836 = vweird.f32 %v830
      %vm837 = vmor %vm835, %vm836
      %v838 = vsel %vm837, %v830, %v834
      %v839 = vand.u32 2147483647, %v814
      %vm840 = vcmp.eq.f32.partialorder %v839, 8.507059e+37
      %v841 = vand.u32 %v814, 2147483648
      %v842 = vor.u32 1.1754944e-38, %v841
      %v843 = vsel %vm840, %v842, %v838
      %v844 = vmul.f32 1.0, %v843
      %v845 = vrcp.pop %v815
      %v846 = vmul.f32 %v815, %v845
      %v847 = vsub.f32 1.0, %v846
      %v848 = vmul.f32 %v845, %v847
      %v849 = vadd.f32 %v845, %v848
      %vm850 = vweird.f32 %v815
      %vm851 = vweird.f32 %v845
      %vm852 = vmor %vm850, %vm851
      %v853 = vsel %vm852, %v845, %v849
      %v854 = vand.u32 2147483647, %v815
      %vm855 = vcmp.eq.f32.partialorder %v854, 8.507059e+37
      %v856 = vand.u32 %v815, 2147483648
      %v857 = vor.u32 1.1754944e-38, %v856
      %v858 = vsel %vm855, %v857, %v853
      %v859 = vmul.f32 1.0, %v858
      %v860 = vrcp.pop %v816
      %v861 = vmul.f32 %v816, %v860
      %v862 = vsub.f32 1.0, %v861
      %v863 = vmul.f32 %v860, %v862
      %v864 = vadd.f32 %v860, %v863
      %vm865 = vweird.f32 %v816
      %vm866 = vweird.f32 %v860
      %vm867 = vmor %vm865, %vm866
      %v868 = vsel %vm867, %v860, %v864
      %v869 = vand.u32 2147483647, %v816
      %vm870 = vcmp.eq.f32.partialorder %v869, 8.507059e+37
      %v871 = vand.u32 %v816, 2147483648
      %v872 = vor.u32 1.1754944e-38, %v871
      %v873 = vsel %vm870, %v872, %v868
      %v874 = vmul.f32 1.0, %v873
      %v875 = vrcp.pop %v817
      %v876 = vmul.f32 %v817, %v875
      %v877 = vsub.f32 1.0, %v876
      %v878 = vmul.f32 %v875, %v877
      %v879 = vadd.f32 %v875, %v878
      %vm880 = vweird.f32 %v817
      %vm881 = vweird.f32 %v875
      %vm882 = vmor %vm880, %vm881
      %v883 = vsel %vm882, %v875, %v879
      %v884 = vand.u32 2147483647, %v817
      %vm885 = vcmp.eq.f32.partialorder %v884, 8.507059e+37
      %v886 = vand.u32 %v817, 2147483648
      %v887 = vor.u32 1.1754944e-38, %v886
      %v888 = vsel %vm885, %v887, %v883
      %v889 = vmul.f32 1.0, %v888
      %v890 = vrcp.pop %v818
      %v891 = vmul.f32 %v818, %v890
      %v892 = vsub.f32 1.0, %v891
      %v893 = vmul.f32 %v890, %v892
      %v894 = vadd.f32 %v890, %v893
      %vm895 = vweird.f32 %v818
      %vm896 = vweird.f32 %v890
      %vm897 = vmor %vm895, %vm896
      %v898 = vsel %vm897, %v890, %v894
      %v899 = vand.u32 2147483647, %v818
      %vm900 = vcmp.eq.f32.partialorder %v899, 8.507059e+37
      %v901 = vand.u32 %v818, 2147483648
      %v902 = vor.u32 1.1754944e-38, %v901
      %v903 = vsel %vm900, %v902, %v898
      %v904 = vmul.f32 1.0, %v903
      %v905 = vrcp.pop %v819
      %v906 = vmul.f32 %v819, %v905
      %v907 = vsub.f32 1.0, %v906
      %v908 = vmul.f32 %v905, %v907
      %v909 = vadd.f32 %v905, %v908
      %vm910 = vweird.f32 %v819
      %vm911 = vweird.f32 %v905
      %vm912 = vmor %vm910, %vm911
      %v913 = vsel %vm912, %v905, %v909
      %v914 = vand.u32 2147483647, %v819
      %vm915 = vcmp.eq.f32.partialorder %v914, 8.507059e+37
      %v916 = vand.u32 %v819, 2147483648
      %v917 = vor.u32 1.1754944e-38, %v916
      %v918 = vsel %vm915, %v917, %v913
      %v919 = vmul.f32 1.0, %v918
      %v920 = vrcp.pop %v820
      %v921 = vmul.f32 %v820, %v920
      %v922 = vsub.f32 1.0, %v921
      %v923 = vmul.f32 %v920, %v922
      %v924 = vadd.f32 %v920, %v923
      %vm925 = vweird.f32 %v820
      %vm926 = vweird.f32 %v920
      %vm927 = vmor %vm925, %vm926
      %v928 = vsel %vm927, %v920, %v924
      %v929 = vand.u32 2147483647, %v820
      %vm930 = vcmp.eq.f32.partialorder %v929, 8.507059e+37
      %v931 = vand.u32 %v820, 2147483648
      %v932 = vor.u32 1.1754944e-38, %v931
      %v933 = vsel %vm930, %v932, %v928
      %v934 = vmul.f32 1.0, %v933
      %v935 = vrcp.pop %v821
      %v936 = vmul.f32 %v821, %v935
      %v937 = vsub.f32 1.0, %v936
      %v938 = vmul.f32 %v935, %v937
      %v939 = vadd.f32 %v935, %v938
      %vm940 = vweird.f32 %v821
      %vm941 = vweird.f32 %v935
      %vm942 = vmor %vm940, %vm941
      %v943 = vsel %vm942, %v935, %v939
      %v944 = vand.u32 2147483647, %v821
      %vm945 = vcmp.eq.f32.partialorder %v944, 8.507059e+37
      %v946 = vand.u32 %v821, 2147483648
      %v947 = vor.u32 1.1754944e-38, %v946
      %v948 = vsel %vm945, %v947, %v943
      %v949 = vmul.f32 1.0, %v948
      %v950 = vrcp.pop %v822
      %v951 = vmul.f32 %v822, %v950
      %v952 = vsub.f32 1.0, %v951
      %v953 = vmul.f32 %v950, %v952
      %v954 = vadd.f32 %v950, %v953
      %vm955 = vweird.f32 %v822
      %vm956 = vweird.f32 %v950
      %vm957 = vmor %vm955, %vm956
      %v958 = vsel %vm957, %v950, %v954
      %v959 = vand.u32 2147483647, %v822
      %vm960 = vcmp.eq.f32.partialorder %v959, 8.507059e+37
      %v961 = vand.u32 %v822, 2147483648
      %v962 = vor.u32 1.1754944e-38, %v961
      %v963 = vsel %vm960, %v962, %v958
      %v964 = vmul.f32 1.0, %v963
      %v965 = vrcp.pop %v823
      %v966 = vmul.f32 %v823, %v965
      %v967 = vsub.f32 1.0, %v966
      %v968 = vmul.f32 %v965, %v967
      %v969 = vadd.f32 %v965, %v968
      %vm970 = vweird.f32 %v823
      %vm971 = vweird.f32 %v965
      %vm972 = vmor %vm970, %vm971
      %v973 = vsel %vm972, %v965, %v969
      %v974 = vand.u32 2147483647, %v823
      %vm975 = vcmp.eq.f32.partialorder %v974, 8.507059e+37
      %v976 = vand.u32 %v823, 2147483648
      %v977 = vor.u32 1.1754944e-38, %v976
      %v978 = vsel %vm975, %v977, %v973
      %v979 = vmul.f32 1.0, %v978
      %v980 = vrcp.pop %v824
      %v981 = vmul.f32 %v824, %v980
      %v982 = vsub.f32 1.0, %v981
      %v983 = vmul.f32 %v980, %v982
      %v984 = vadd.f32 %v980, %v983
      %vm985 = vweird.f32 %v824
      %vm986 = vweird.f32 %v980
      %vm987 = vmor %vm985, %vm986
      %v988 = vsel %vm987, %v980, %v984
      %v989 = vand.u32 2147483647, %v824
      %vm990 = vcmp.eq.f32.partialorder %v989, 8.507059e+37
      %v991 = vand.u32 %v824, 2147483648
      %v992 = vor.u32 1.1754944e-38, %v991
      %v993 = vsel %vm990, %v992, %v988
      %v994 = vmul.f32 1.0, %v993
      %v995 = vrcp.pop %v825
      %v996 = vmul.f32 %v825, %v995
      %v997 = vsub.f32 1.0, %v996
      %v998 = vmul.f32 %v995, %v997
      %v999 = vadd.f32 %v995, %v998
      %vm1000 = vweird.f32 %v825
      %vm1001 = vweird.f32 %v995
      %vm1002 = vmor %vm1000, %vm1001
      %v1003 = vsel %vm1002, %v995, %v999
      %v1004 = vand.u32 2147483647, %v825
      %vm1005 = vcmp.eq.f32.partialorder %v1004, 8.507059e+37
      %v1006 = vand.u32 %v825, 2147483648
      %v1007 = vor.u32 1.1754944e-38, %v1006
      %v1008 = vsel %vm1005, %v1007, %v1003
      %v1009 = vmul.f32 1.0, %v1008
      %v1010 = vrcp.pop %v826
      %v1011 = vmul.f32 %v826, %v1010
      %v1012 = vsub.f32 1.0, %v1011
      %v1013 = vmul.f32 %v1010, %v1012
      %v1014 = vadd.f32 %v1010, %v1013
      %vm1015 = vweird.f32 %v826
      %vm1016 = vweird.f32 %v1010
      %vm1017 = vmor %vm1015, %vm1016
      %v1018 = vsel %vm1017, %v1010, %v1014
      %v1019 = vand.u32 2147483647, %v826
      %vm1020 = vcmp.eq.f32.partialorder %v1019, 8.507059e+37
      %v1021 = vand.u32 %v826, 2147483648
      %v1022 = vor.u32 1.1754944e-38, %v1021
      %v1023 = vsel %vm1020, %v1022, %v1018
      %v1024 = vmul.f32 1.0, %v1023
      %v1025 = vrcp.pop %v827
      %v1026 = vmul.f32 %v827, %v1025
      %v1027 = vsub.f32 1.0, %v1026
      %v1028 = vmul.f32 %v1025, %v1027
      %v1029 = vadd.f32 %v1025, %v1028
      %vm1030 = vweird.f32 %v827
      %vm1031 = vweird.f32 %v1025
      %vm1032 = vmor %vm1030, %vm1031
      %v1033 = vsel %vm1032, %v1025, %v1029
      %v1034 = vand.u32 2147483647, %v827
      %vm1035 = vcmp.eq.f32.partialorder %v1034, 8.507059e+37
      %v1036 = vand.u32 %v827, 2147483648
      %v1037 = vor.u32 1.1754944e-38, %v1036
      %v1038 = vsel %vm1035, %v1037, %v1033
      %v1039 = vmul.f32 1.0, %v1038
      %v1040 = vrcp.pop %v828
      %v1041 = vmul.f32 %v828, %v1040
      %v1042 = vsub.f32 1.0, %v1041
      %v1043 = vmul.f32 %v1040, %v1042
      %v1044 = vadd.f32 %v1040, %v1043
      %vm1045 = vweird.f32 %v828
      %vm1046 = vweird.f32 %v1040
      %vm1047 = vmor %vm1045, %vm1046
      %v1048 = vsel %vm1047, %v1040, %v1044
      %v1049 = vand.u32 2147483647, %v828
      %vm1050 = vcmp.eq.f32.partialorder %v1049, 8.507059e+37
      %v1051 = vand.u32 %v828, 2147483648
      %v1052 = vor.u32 1.1754944e-38, %v1051
      %v1053 = vsel %vm1050, %v1052, %v1048
      %v1054 = vmul.f32 1.0, %v1053
      %v1055 = vrcp.pop %v829
      %v1056 = vmul.f32 %v829, %v1055
      %v1057 = vsub.f32 1.0, %v1056
      %v1058 = vmul.f32 %v1055, %v1057
      %v1059 = vadd.f32 %v1055, %v1058
      %vm1060 = vweird.f32 %v829
      %vm1061 = vweird.f32 %v1055
      %vm1062 = vmor %vm1060, %vm1061
      %v1063 = vsel %vm1062, %v1055, %v1059
      %v1064 = vand.u32 2147483647, %v829
      %vm1065 = vcmp.eq.f32.partialorder %v1064, 8.507059e+37
      %v1066 = vand.u32 %v829, 2147483648
      %v1067 = vor.u32 1.1754944e-38, %v1066
      %v1068 = vsel %vm1065, %v1067, %v1063
      %v1069 = vmul.f32 1.0, %v1068
      %vm1070 = vcmask 7168
      %1071 = vst.msk [vmem:[%s281] sm:$0xff] %vm1070, %v844
      %1072 = vst.msk [vmem:[%s281 + $0x8] sm:$0xff] %vm1070, %v859
      %1073 = vst.msk [vmem:[%s281 + $0x10] sm:$0xff] %vm1070, %v874
      %1074 = vst.msk [vmem:[%s281 + $0x18] sm:$0xff] %vm1070, %v889
      %1075 = vst.msk [vmem:[%s281 + $0x20] sm:$0xff] %vm1070, %v904
      %1076 = vst.msk [vmem:[%s281 + $0x28] sm:$0xff] %vm1070, %v919
      %1077 = vst.msk [vmem:[%s281 + $0x30] sm:$0xff] %vm1070, %v934
      %1078 = vst.msk [vmem:[%s281 + $0x38] sm:$0xff] %vm1070, %v949
      %1079 = vst.msk [vmem:[%s281 + $0x40] sm:$0xff] %vm1070, %v964
      %1080 = vst.msk [vmem:[%s281 + $0x48] sm:$0xff] %vm1070, %v979
      %1081 = vst.msk [vmem:[%s281 + $0x50] sm:$0xff] %vm1070, %v994
      %1082 = vst.msk [vmem:[%s281 + $0x58] sm:$0xff] %vm1070, %v1009
      %1083 = vst.msk [vmem:[%s281 + $0x60] sm:$0xff] %vm1070, %v1024
      %1084 = vst.msk [vmem:[%s281 + $0x68] sm:$0xff] %vm1070, %v1039
      %1085 = vst.msk [vmem:[%s281 + $0x70] sm:$0xff] %vm1070, %v1054
      %1086 = vst.msk [vmem:[%s281 + $0x78] sm:$0xff] %vm1070, %v1069
      %s1087 = smul.u32 16, %s19
      %p1088 = scmp.lt.s32.totalorder %s1087, 31
      %s1089 = scalar_select %p1088, %s1087, 31
      %s1090 = smul.addr %s1089, 8
      %s1091 = scalar_lea.vmem %s7, %s1090
      // Predicated region
      $region49: #{tpu_custom_call.1} parent=47 // pred_check
        %p1092 = pneg %p189
      $region50: #{tpu_custom_call.1} parent=47 // pred_check_branch
        %1094 = sbr.rel (%p1092) target = $region52
      $region51: #{tpu_custom_call.1} parent=47 // pred_region
        %s1095 = smul.u32 16, %s19
      $region52: #{tpu_custom_call.1} parent=47 // pred_fallthru
        _
    $region48: #{tpu_custom_call.1} parent=5 // pred_fallthru
      _
    %p1096 = scmp.le.s32.totalorder 2, %s14
    // Predicated region
    $region53: #{tpu_custom_call.1} parent=5 // pred_check
      %p1097 = pneg %p1096
    $region54: #{tpu_custom_call.1} parent=5 // pred_check_branch
      %1099 = sbr.rel (%p1097) target = $region56
    $region55: #{tpu_custom_call.1} parent=5 // pred_region
      %s1100 = ssub.s32 %s14, 2
      // Predicated region
      $region57: #{tpu_custom_call.1} parent=55 // pred_check
        %p1101 = pneg %p195
      $region58: #{tpu_custom_call.1} parent=55 // pred_check_branch
        %1103 = sbr.rel (%p1101) target = $region60
      $region59: #{tpu_custom_call.1} parent=55 // pred_region
        %s1104 = smul.u32 16, %s20
        %p1105 = scmp.lt.s32.totalorder %s1104, 31
        %s1106 = scalar_select %p1105, %s1104, 31
        %s1107 = smul.addr %s1106, 8
        %s1108 = scalar_lea.vmem %s7, %s1107
      $region60: #{tpu_custom_call.1} parent=55 // pred_fallthru
        _
    $region56: #{tpu_custom_call.1} parent=5 // pred_fallthru
      _
  $region6: #{tpu_custom_call.1} parent=0 // loop_footer
    %s18 = sadd.s32 1, %s14
  $region7: #{tpu_custom_call.1} parent=0 // loop_footer_branch
    %13 = sbr.rel target = $region3
  $region8: #{tpu_custom_call.1} parent=0 // loop_exit
    _

// kernel: tpu_custom_call.1
$region0: #{tpu_custom_call.1}
  #allocation0 [shape = 'u32[]', space=smem, size = 0x4, offset = 0x4, fixed_abs, tag = 'smem constant byte address 0x4 - core index']
  #allocation1 [shape = 'u32[72,128]{1,0:T(1,128)}', space=vmem, size = 0x9000, scoped, tag = 'internal scratch']
  #allocation2 [shape = 'bf16[128,64]{1,0:T(8,128)(2,1)}', space=vmem, size = 0x8000, scoped, tag = 'scratch operand']
  #allocation3 [shape = 'f32[1,1]{1,0:T(1,128)S(6)}', space=smem, size = 0x200, scoped, tag = 'scoped memory for tpu_custom_call.1']
  %s0 = inlined_call_operand.vmem [shape: bf16[256,64], index: 0, kind: input, shape index: {}]
  %s1 = inlined_call_operand.vmem [shape: bf16[64,64], index: 1, kind: input, shape index: {}]
  %s2 = inlined_call_operand.vmem [shape: f32[1,64], index: 2, kind: input, shape index: {}]
  %s3 = inlined_call_operand.vmem [shape: bf16[64,64], index: 3, kind: input, shape index: {}]
  %s4 = inlined_call_operand.vmem [shape: f32[1,64], index: 4, kind: input, shape index: {}]
  %s5 = inlined_call_operand.vmem [shape: f32[1,64], index: 5, kind: input, shape index: {}]
  %s6 = inlined_call_operand.<no memory space> [shape: f32[1,1], index: 6, kind: input, shape index: {}]
  %s7 = inlined_call_operand.vmem [shape: f32[256,1], index: 7, kind: output, shape index: {}]
  %s8 = sld [smem:[#allocation0]]
  $region61: #{tpu_custom_call.1} parent=0
    _
  %s10 = ssub.s32 1, %s8
  %s11 = scalar_select 0, %s10, %s8
  %12 = sst [smem:[#allocation3]] %s6
  loop: start=0, step=1, limit=4
  $region2: #{tpu_custom_call.1} parent=0 // loop_pre_header
    _
  $region3: #{tpu_custom_call.1} parent=0 // loop_header
    %s14 = sphi 0, %s18
    %p15 = scmp.ge.s32.totalorder %s14, 4
    %s24 = sphi 0, %s26
    %s27 = sphi 0, %s24
    %s28 = sphi 0, %s27
    %s44 = sphi 0, %s28
    %s48 = sphi 0, %s48
    %s50 = sphi 0, %s48
    %s51 = sphi 0, %s50
    %s65 = sphi 0, %s51
    %s69 = sphi 0, %s69
    %s71 = sphi 0, %s69
    %s72 = sphi 0, %s71
    %s86 = sphi 0, %s72
    %s90 = sphi 0, %s90
    %s92 = sphi 0, %s90
    %s93 = sphi 0, %s92
    %s107 = sphi 0, %s93
    %s111 = sphi 0, %s111
    %s113 = sphi 0, %s111
    %s114 = sphi 0, %s113
    %s128 = sphi 0, %s114
    %s132 = sphi 0, %s132
    %s134 = sphi 0, %s132
    %s135 = sphi 0, %s134
    %s149 = sphi 0, %s135
    %s153 = sphi 0, %s153
    %s155 = sphi 0, %s153
    %s156 = sphi 0, %s155
    %s170 = sphi 0, %s156
    %s176 = sphi 0, %s178
    %s179 = sphi 0, %s176
    %s180 = sphi 0, %s179
    %s196 = sphi 0, %s180
  $region4: #{tpu_custom_call.1} parent=0 // loop_header_branch
    %17 = sbr.rel (%p15) target = $region8
  $region5: #{tpu_custom_call.1} parent=0 // loop_body
    %s19 = ssub.s32 %s14, 1
    %s20 = ssub.s32 %s14, 2
    %s21 = sadd.s32 %s14, 1
    %s22 = ssub.s32 %s14, %s21
    %p23 = scmp.eq.s32.totalorder %s22, 0
    %s25 = sadd.s32 %s24, 1
    %s26 = scalar_select %p23, %s24, %s25
    %p29 = pneg %p23
    %p30 = scmp.eq.s32.totalorder %s14, 1
    %p31 = por %p29, %p30
    %p32 = scmp.ne.s32.totalorder %s24, %s27
    %p33 = scmp.eq.s32.totalorder %s14, 0
    %p34 = por %p32, %p33
    %p35 = scmp.ne.s32.totalorder %s24, %s27
    %p36 = scmp.eq.s32.totalorder %s19, 1
    %p37 = por %p35, %p36
    %p38 = scmp.ne.s32.totalorder %s27, %s28
    %p39 = scmp.eq.s32.totalorder %s19, 0
    %p40 = por %p38, %p39
    %p41 = scmp.ne.s32.totalorder %s27, %s28
    %p42 = scmp.eq.s32.totalorder %s20, 1
    %p43 = por %p41, %p42
    %p45 = scmp.ne.s32.totalorder %s28, %s44
    %p46 = scmp.eq.s32.totalorder %s20, 0
    %p47 = por %p45, %p46
    %s49 = sadd.s32 %s48, 1
    %p52 = scmp.eq.s32.totalorder %s14, 1
    %p53 = scmp.ne.s32.totalorder %s48, %s50
    %p54 = scmp.eq.s32.totalorder %s14, 0
    %p55 = por %p53, %p54
    %p56 = scmp.ne.s32.totalorder %s48, %s50
    %p57 = scmp.eq.s32.totalorder %s19, 1
    %p58 = por %p56, %p57
    %p59 = scmp.ne.s32.totalorder %s50, %s51
    %p60 = scmp.eq.s32.totalorder %s19, 0
    %p61 = por %p59, %p60
    %p62 = scmp.ne.s32.totalorder %s50, %s51
    %p63 = scmp.eq.s32.totalorder %s20, 1
    %p64 = por %p62, %p63
    %p66 = scmp.ne.s32.totalorder %s51, %s65
    %p67 = scmp.eq.s32.totalorder %s20, 0
    %p68 = por %p66, %p67
    %s70 = sadd.s32 %s69, 1
    %p73 = scmp.eq.s32.totalorder %s14, 1
    %p74 = scmp.ne.s32.totalorder %s69, %s71
    %p75 = scmp.eq.s32.totalorder %s14, 0
    %p76 = por %p74, %p75
    %p77 = scmp.ne.s32.totalorder %s69, %s71
    %p78 = scmp.eq.s32.totalorder %s19, 1
    %p79 = por %p77, %p78
    %p80 = scmp.ne.s32.totalorder %s71, %s72
    %p81 = scmp.eq.s32.totalorder %s19, 0
    %p82 = por %p80, %p81
    %p83 = scmp.ne.s32.totalorder %s71, %s72
    %p84 = scmp.eq.s32.totalorder %s20, 1
    %p85 = por %p83, %p84
    %p87 = scmp.ne.s32.totalorder %s72, %s86
    %p88 = scmp.eq.s32.totalorder %s20, 0
    %p89 = por %p87, %p88
    %s91 = sadd.s32 %s90, 1
    %p94 = scmp.eq.s32.totalorder %s14, 1
    %p95 = scmp.ne.s32.totalorder %s90, %s92
    %p96 = scmp.eq.s32.totalorder %s14, 0
    %p97 = por %p95, %p96
    %p98 = scmp.ne.s32.totalorder %s90, %s92
    %p99 = scmp.eq.s32.totalorder %s19, 1
    %p100 = por %p98, %p99
    %p101 = scmp.ne.s32.totalorder %s92, %s93
    %p102 = scmp.eq.s32.totalorder %s19, 0
    %p103 = por %p101, %p102
    %p104 = scmp.ne.s32.totalorder %s92, %s93
    %p105 = scmp.eq.s32.totalorder %s20, 1
    %p106 = por %p104, %p105
    %p108 = scmp.ne.s32.totalorder %s93, %s107
    %p109 = scmp.eq.s32.totalorder %s20, 0
    %p110 = por %p108, %p109
    %s112 = sadd.s32 %s111, 1
    %p115 = scmp.eq.s32.totalorder %s14, 1
    %p116 = scmp.ne.s32.totalorder %s111, %s113
    %p117 = scmp.eq.s32.totalorder %s14, 0
    %p118 = por %p116, %p117
    %p119 = scmp.ne.s32.totalorder %s111, %s113
    %p120 = scmp.eq.s32.totalorder %s19, 1
    %p121 = por %p119, %p120
    %p122 = scmp.ne.s32.totalorder %s113, %s114
    %p123 = scmp.eq.s32.totalorder %s19, 0
    %p124 = por %p122, %p123
    %p125 = scmp.ne.s32.totalorder %s113, %s114
    %p126 = scmp.eq.s32.totalorder %s20, 1
    %p127 = por %p125, %p126
    %p129 = scmp.ne.s32.totalorder %s114, %s128
    %p130 = scmp.eq.s32.totalorder %s20, 0
    %p131 = por %p129, %p130
    %s133 = sadd.s32 %s132, 1
    %p136 = scmp.eq.s32.totalorder %s14, 1
    %p137 = scmp.ne.s32.totalorder %s132, %s134
    %p138 = scmp.eq.s32.totalorder %s14, 0
    %p139 = por %p137, %p138
    %p140 = scmp.ne.s32.totalorder %s132, %s134
    %p141 = scmp.eq.s32.totalorder %s19, 1
    %p142 = por %p140, %p141
    %p143 = scmp.ne.s32.totalorder %s134, %s135
    %p144 = scmp.eq.s32.totalorder %s19, 0
    %p145 = por %p143, %p144
    %p146 = scmp.ne.s32.totalorder %s134, %s135
    %p147 = scmp.eq.s32.totalorder %s20, 1
    %p148 = por %p146, %p147
    %p150 = scmp.ne.s32.totalorder %s135, %s149
    %p151 = scmp.eq.s32.totalorder %s20, 0
    %p152 = por %p150, %p151
    %s154 = sadd.s32 %s153, 1
    %p157 = scmp.eq.s32.totalorder %s14, 1
    %p158 = scmp.ne.s32.totalorder %s153, %s155
    %p159 = scmp.eq.s32.totalorder %s14, 0
    %p160 = por %p158, %p159
    %p161 = scmp.ne.s32.totalorder %s153, %s155
    %p162 = scmp.eq.s32.totalorder %s19, 1
    %p163 = por %p161, %p162
    %p164 = scmp.ne.s32.totalorder %s155, %s156
    %p165 = scmp.eq.s32.totalorder %s19, 0
    %p166 = por %p164, %p165
    %p167 = scmp.ne.s32.totalorder %s155, %s156
    %p168 = scmp.eq.s32.totalorder %s20, 1
    %p169 = por %p167, %p168
    %p171 = scmp.ne.s32.totalorder %s156, %s170
    %p172 = scmp.eq.s32.totalorder %s20, 0
    %p173 = por %p171, %p172
    %s174 = ssub.s32 %s14, %s21
    %p175 = scmp.eq.s32.totalorder %s174, 0
    %s177 = sadd.s32 %s176, 1
    %s178 = scalar_select %p175, %s176, %s177
    %p181 = pneg %p175
    %p182 = scmp.eq.s32.totalorder %s14, 1
    %p183 = por %p181, %p182
    %p184 = scmp.ne.s32.totalorder %s176, %s179
    %p185 = scmp.eq.s32.totalorder %s14, 0
    %p186 = por %p184, %p185
    %p187 = scmp.ne.s32.totalorder %s176, %s179
    %p188 = scmp.eq.s32.totalorder %s19, 1
    %p189 = por %p187, %p188
    %p190 = scmp.ne.s32.totalorder %s179, %s180
    %p191 = scmp.eq.s32.totalorder %s19, 0
    %p192 = por %p190, %p191
    %p193 = scmp.ne.s32.totalorder %s179, %s180
    %p194 = scmp.eq.s32.totalorder %s20, 1
    %p195 = por %p193, %p194
    %p197 = scmp.ne.s32.totalorder %s180, %s196
    %p198 = scmp.eq.s32.totalorder %s20, 0
    %p199 = por %p197, %p198
    %p200 = scmp.le.s32.totalorder 1, %s14
    %p201 = scmp.lt.s32.totalorder %s14, 3
    %p202 = pnand %p200, %p201
    %p203 = pneg %p202
    // Predicated region
    $region9: #{tpu_custom_call.1} parent=5 // pred_check
      _
    $region10: #{tpu_custom_call.1} parent=5 // pred_check_branch
      %205 = sbr.rel (%p202) target = $region12
    $region11: #{tpu_custom_call.1} parent=5 // pred_region
      %s206 = ssub.s32 %s14, 1
      // Predicated region
      $region13: #{tpu_custom_call.1} parent=11 // pred_check
        %p207 = pneg %p61
      $region14: #{tpu_custom_call.1} parent=11 // pred_check_branch
        %209 = sbr.rel (%p207) target = $region16
      $region15: #{tpu_custom_call.1} parent=11 // pred_region
        _
      $region16: #{tpu_custom_call.1} parent=11 // pred_fallthru
        _
      // Predicated region
      $region17: #{tpu_custom_call.1} parent=11 // pred_check
        %p210 = pneg %p82
      $region18: #{tpu_custom_call.1} parent=11 // pred_check_branch
        %212 = sbr.rel (%p210) target = $region20
      $region19: #{tpu_custom_call.1} parent=11 // pred_region
        _
      $region20: #{tpu_custom_call.1} parent=11 // pred_fallthru
        _
      // Predicated region
      $region21: #{tpu_custom_call.1} parent=11 // pred_check
        %p213 = pneg %p103
      $region22: #{tpu_custom_call.1} parent=11 // pred_check_branch
        %215 = sbr.rel (%p213) target = $region24
      $region23: #{tpu_custom_call.1} parent=11 // pred_region
        _
      $region24: #{tpu_custom_call.1} parent=11 // pred_fallthru
        _
      // Predicated region
      $region25: #{tpu_custom_call.1} parent=11 // pred_check
        %p216 = pneg %p124
      $region26: #{tpu_custom_call.1} parent=11 // pred_check_branch
        %218 = sbr.rel (%p216) target = $region28
      $region27: #{tpu_custom_call.1} parent=11 // pred_region
        _
      $region28: #{tpu_custom_call.1} parent=11 // pred_fallthru
        _
      // Predicated region
      $region29: #{tpu_custom_call.1} parent=11 // pred_check
        %p219 = pneg %p145
      $region30: #{tpu_custom_call.1} parent=11 // pred_check_branch
        %221 = sbr.rel (%p219) target = $region32
      $region31: #{tpu_custom_call.1} parent=11 // pred_region
        _
      $region32: #{tpu_custom_call.1} parent=11 // pred_fallthru
        _
      // Predicated region
      $region33: #{tpu_custom_call.1} parent=11 // pred_check
        %p222 = pneg %p166
      $region34: #{tpu_custom_call.1} parent=11 // pred_check_branch
        %224 = sbr.rel (%p222) target = $region36
      $region35: #{tpu_custom_call.1} parent=11 // pred_region
        _
      $region36: #{tpu_custom_call.1} parent=11 // pred_fallthru
        _
    $region12: #{tpu_custom_call.1} parent=5 // pred_fallthru
      _
    %p225 = scmp.lt.s32.totalorder %s14, 2
    // Predicated region
    $region37: #{tpu_custom_call.1} parent=5 // pred_check
      %p226 = pneg %p225
    $region38: #{tpu_custom_call.1} parent=5 // pred_check_branch
      %228 = sbr.rel (%p226) target = $region40
    $region39: #{tpu_custom_call.1} parent=5 // pred_region
      // Predicated region
      $region41: #{tpu_custom_call.1} parent=39 // pred_check
        %p229 = pneg %p34
      $region42: #{tpu_custom_call.1} parent=39 // pred_check_branch
        %231 = sbr.rel (%p229) target = $region44
      $region43: #{tpu_custom_call.1} parent=39 // pred_region
        %s232 = smul.u32 16, %s14
        %p233 = scmp.lt.s32.totalorder %s232, 31
        %s234 = scalar_select %p233, %s232, 31
        %s235 = smul.addr %s234, 4
        %s236 = scalar_lea.vmem %s0, %s235
        %s237 = smul.u32 16, %s14
      $region44: #{tpu_custom_call.1} parent=39 // pred_fallthru
        _
    $region40: #{tpu_custom_call.1} parent=5 // pred_fallthru
      _
    %p238 = scmp.le.s32.totalorder 1, %s14
    %p239 = scmp.lt.s32.totalorder %s14, 3
    %p240 = pnand %p238, %p239
    %p241 = pneg %p240
    // Predicated region
    $region45: #{tpu_custom_call.1} parent=5 // pred_check
      _
    $region46: #{tpu_custom_call.1} parent=5 // pred_check_branch
      %243 = sbr.rel (%p240) target = $region48
    $region47: #{tpu_custom_call.1} parent=5 // pred_region
      %s244 = ssub.s32 %s14, 1
      %s245 = smul.u32 16, %s19
      %p246 = scmp.lt.s32.totalorder %s245, 31
      %s247 = scalar_select %p246, %s245, 31
      %s248 = smul.addr %s247, 4
      %s249 = scalar_lea.vmem %s0, %s248
      %p250 = pneg %p40
      %p251 = pneg %p37
      %p252 = pneg %p61
      %p253 = pneg %p58
      %p254 = pneg %p82
      %p255 = pneg %p79
      %p256 = pneg %p103
      %p257 = pneg %p100
      %p258 = pneg %p124
      %p259 = pneg %p121
      %p260 = pneg %p145
      %p261 = pneg %p142
      %p262 = pneg %p166
      %p263 = pneg %p163
      %p264 = pneg %p192
      %p265 = pneg %p189
      %s266 = smul.u32 16, %s19
      %p267 = scmp.lt.s32.totalorder %s266, 31
      %s268 = scalar_select %p267, %s266, 31
      %s269 = smul.addr %s268, 8
      %s270 = scalar_lea.vmem %s7, %s269
      %s271 = smul.u32 16, %s19
      %p272 = scmp.lt.s32.totalorder %s271, 31
      %s273 = scalar_select %p272, %s271, 31
      %s274 = smul.addr %s273, 4
      %s275 = scalar_lea.vmem %s0, %s274
      %s276 = smul.u32 16, %s19
      %s277 = smul.u32 16, %s19
      %p278 = scmp.lt.s32.totalorder %s277, 31
      %s279 = scalar_select %p278, %s277, 31
      %s280 = smul.addr %s279, 8
      %s281 = scalar_lea.vmem %s7, %s280
      %s282 = smul.u32 16, %s19
      %v284 = vld [vmem:[%s275] sm:$0xf]
      %v285 = vld [vmem:[%s275 + $0x4] sm:$0xf]
      %v286 = vld [vmem:[%s275 + $0x8] sm:$0xf]
      %v287 = vld [vmem:[%s275 + $0xc] sm:$0xf]
      %v288 = vld [vmem:[%s275 + $0x10] sm:$0xf]
      %v289 = vld [vmem:[%s275 + $0x14] sm:$0xf]
      %v290 = vld [vmem:[%s275 + $0x18] sm:$0xf]
      %v291 = vld [vmem:[%s275 + $0x1c] sm:$0xf]
      %v292 = vld [vmem:[%s275 + $0x20] sm:$0xf]
      %v293 = vld [vmem:[%s275 + $0x24] sm:$0xf]
      %v294 = vld [vmem:[%s275 + $0x28] sm:$0xf]
      %v295 = vld [vmem:[%s275 + $0x2c] sm:$0xf]
      %v296 = vld [vmem:[%s275 + $0x30] sm:$0xf]
      %v297 = vld [vmem:[%s275 + $0x34] sm:$0xf]
      %v298 = vld [vmem:[%s275 + $0x38] sm:$0xf]
      %v299 = vld [vmem:[%s275 + $0x3c] sm:$0xf]
      %v300 = vld [vmem:[%s1] sm:$0xf]
      %v301 = vld [vmem:[%s1 + $0x4] sm:$0xf]
      %v302 = vld [vmem:[%s1 + $0x8] sm:$0xf]
      %v303 = vld [vmem:[%s1 + $0xc] sm:$0xf]
      %v304 = vld [vmem:[%s1 + $0x10] sm:$0xf]
      %v305 = vld [vmem:[%s1 + $0x14] sm:$0xf]
      %v306 = vld [vmem:[%s1 + $0x18] sm:$0xf]
      %v307 = vld [vmem:[%s1 + $0x1c] sm:$0xf]
      %v308 = vld [vmem:[%s2] sm:$0x1]
      %v310 = vperm.slane %v308, 0
      %v328 = vunpack.c.l.b16 %v284
      %v329 = vunpack.c.l.b16 %v285
      %v330 = vunpack.c.l.b16 %v286
      %v331 = vunpack.c.l.b16 %v287
      %v332 = vunpack.c.l.b16 %v288
      %v333 = vunpack.c.l.b16 %v289
      %v334 = vunpack.c.l.b16 %v290
      %v335 = vunpack.c.l.b16 %v291
      %v336 = vunpack.c.l.b16 %v292
      %v337 = vunpack.c.l.b16 %v293
      %v338 = vunpack.c.l.b16 %v294
      %v339 = vunpack.c.l.b16 %v295
      %v340 = vunpack.c.l.b16 %v296
      %v341 = vunpack.c.l.b16 %v297
      %v342 = vunpack.c.l.b16 %v298
      %v343 = vunpack.c.l.b16 %v299
      %v344 = vpack.c.b16 %v329, %v328
      %v345 = vpack.c.b16 %v331, %v330
      %v346 = vpack.c.b16 %v333, %v332
      %v347 = vpack.c.b16 %v335, %v334
      %v348 = vpack.c.b16 %v337, %v336
      %v349 = vpack.c.b16 %v339, %v338
      %v350 = vpack.c.b16 %v341, %v340
      %v351 = vpack.c.b16 %v343, %v342
      %v360 = vunpack.c.l.b16 %v300
      %v361 = vunpack.c.l.b16 %v301
      %v362 = vunpack.c.l.b16 %v302
      %v363 = vunpack.c.l.b16 %v303
      %v364 = vunpack.c.l.b16 %v304
      %v365 = vunpack.c.l.b16 %v305
      %v366 = vunpack.c.l.b16 %v306
      %v367 = vunpack.c.l.b16 %v307
      %v368 = vpack.c.b16 %v361, %v360
      %v369 = vpack.c.b16 %v363, %v362
      %v370 = vpack.c.b16 %v365, %v364
      %v371 = vpack.c.b16 %v367, %v366
      %vm376 = vcmask 523264
      %v378 = vsel %vm376, %v344, 0
      %v381 = vsel %vm376, %v345, 0
      %v384 = vsel %vm376, %v346, 0
      %v387 = vsel %vm376, %v347, 0
      %v390 = vsel %vm376, %v348, 0
      %v393 = vsel %vm376, %v349, 0
      %v396 = vsel %vm376, %v350, 0
      %v399 = vsel %vm376, %v351, 0
      %401 = vmatpush.bf16.msra.mxu0 0
      %402 = vmatpush.bf16.msra.mxu0 0
      %403 = vmatpush.bf16.msra.mxu0 0
      %404 = vmatpush.bf16.msra.mxu0 0
      %405 = vmatpush.bf16.msra.mxu0 %v371
      %406 = vmatpush.bf16.msra.mxu0 %v370
      %407 = vmatpush.bf16.msra.mxu0 %v369
      %408 = vmatpush.bf16.msra.mxu0 %v368
      %409 = vmatmul.bf16.gmra.mxu0 %v378
      %v410 = vpop.f32.mrf.mxu0
      %v411 = vadd.f32 %v310, %v410
      %v412 = vpop.f32.mrf.mxu0
      %v413 = vadd.f32 %v310, %v412
      %414 = vmatmul.bf16.gmra.mxu0 %v381
      %v415 = vpop.f32.mrf.mxu0
      %v416 = vadd.f32 %v310, %v415
      %v417 = vpop.f32.mrf.mxu0
      %v418 = vadd.f32 %v310, %v417
      %419 = vmatmul.bf16.gmra.mxu0 %v384
      %v420 = vpop.f32.mrf.mxu0
      %v421 = vadd.f32 %v310, %v420
      %v422 = vpop.f32.mrf.mxu0
      %v423 = vadd.f32 %v310, %v422
      %424 = vmatmul.bf16.gmra.mxu0 %v387
      %v425 = vpop.f32.mrf.mxu0
      %v426 = vadd.f32 %v310, %v425
      %v427 = vpop.f32.mrf.mxu0
      %v428 = vadd.f32 %v310, %v427
      %429 = vmatmul.bf16.gmra.mxu0 %v390
      %v430 = vpop.f32.mrf.mxu0
      %v431 = vadd.f32 %v310, %v430
      %v432 = vpop.f32.mrf.mxu0
      %v433 = vadd.f32 %v310, %v432
      %434 = vmatmul.bf16.gmra.mxu0 %v393
      %v435 = vpop.f32.mrf.mxu0
      %v436 = vadd.f32 %v310, %v435
      %v437 = vpop.f32.mrf.mxu0
      %v438 = vadd.f32 %v310, %v437
      %439 = vmatmul.bf16.gmra.mxu0 %v396
      %v440 = vpop.f32.mrf.mxu0
      %v441 = vadd.f32 %v310, %v440
      %v442 = vpop.f32.mrf.mxu0
      %v443 = vadd.f32 %v310, %v442
      %444 = vmatmul.bf16.gmra.mxu0 %v399
      %v445 = vpop.f32.mrf.mxu0
      %v446 = vadd.f32 %v310, %v445
      %v447 = vpop.f32.mrf.mxu0
      %v448 = vadd.f32 %v310, %v447
      %449 = vdwg.mxu0
      %v450 = vmax.f32 %v411, 0.0
      %v451 = vmax.f32 %v413, 0.0
      %v452 = vmax.f32 %v416, 0.0
      %v453 = vmax.f32 %v418, 0.0
      %v454 = vmax.f32 %v421, 0.0
      %v455 = vmax.f32 %v423, 0.0
      %v456 = vmax.f32 %v426, 0.0
      %v457 = vmax.f32 %v428, 0.0
      %v458 = vmax.f32 %v431, 0.0
      %v459 = vmax.f32 %v433, 0.0
      %v460 = vmax.f32 %v436, 0.0
      %v461 = vmax.f32 %v438, 0.0
      %v462 = vmax.f32 %v441, 0.0
      %v463 = vmax.f32 %v443, 0.0
      %v464 = vmax.f32 %v446, 0.0
      %v465 = vmax.f32 %v448, 0.0
      %v466 = vpack.c.bf16 %v450, %v450
      %v467 = vpack.c.bf16 %v451, %v451
      %v468 = vpack.c.bf16 %v452, %v452
      %v469 = vpack.c.bf16 %v453, %v453
      %v470 = vpack.c.bf16 %v454, %v454
      %v471 = vpack.c.bf16 %v455, %v455
      %v472 = vpack.c.bf16 %v456, %v456
      %v473 = vpack.c.bf16 %v457, %v457
      %v474 = vpack.c.bf16 %v458, %v458
      %v475 = vpack.c.bf16 %v459, %v459
      %v476 = vpack.c.bf16 %v460, %v460
      %v477 = vpack.c.bf16 %v461, %v461
      %v478 = vpack.c.bf16 %v462, %v462
      %v479 = vpack.c.bf16 %v463, %v463
      %v480 = vpack.c.bf16 %v464, %v464
      %v481 = vpack.c.bf16 %v465, %v465
      %vm482 = vcmask 519168
      %483 = vst.msk [vmem:[#allocation2] sm:$0xf] %vm482, %v466
      %484 = vst.msk [vmem:[#allocation2 + $0x4] sm:$0xf] %vm482, %v467
      %485 = vst.msk [vmem:[#allocation2 + $0x8] sm:$0xf] %vm482, %v468
      %486 = vst.msk [vmem:[#allocation2 + $0xc] sm:$0xf] %vm482, %v469
      %487 = vst.msk [vmem:[#allocation2 + $0x10] sm:$0xf] %vm482, %v470
      %488 = vst.msk [vmem:[#allocation2 + $0x14] sm:$0xf] %vm482, %v471
      %489 = vst.msk [vmem:[#allocation2 + $0x18] sm:$0xf] %vm482, %v472
      %490 = vst.msk [vmem:[#allocation2 + $0x1c] sm:$0xf] %vm482, %v473
      %491 = vst.msk [vmem:[#allocation2 + $0x20] sm:$0xf] %vm482, %v474
      %492 = vst.msk [vmem:[#allocation2 + $0x24] sm:$0xf] %vm482, %v475
      %493 = vst.msk [vmem:[#allocation2 + $0x28] sm:$0xf] %vm482, %v476
      %494 = vst.msk [vmem:[#allocation2 + $0x2c] sm:$0xf] %vm482, %v477
      %495 = vst.msk [vmem:[#allocation2 + $0x30] sm:$0xf] %vm482, %v478
      %496 = vst.msk [vmem:[#allocation2 + $0x34] sm:$0xf] %vm482, %v479
      %497 = vst.msk [vmem:[#allocation2 + $0x38] sm:$0xf] %vm482, %v480
      %498 = vst.msk [vmem:[#allocation2 + $0x3c] sm:$0xf] %vm482, %v481
      %v499 = vld [vmem:[#allocation2] sm:$0xf]
      %v500 = vld [vmem:[#allocation2 + $0x4] sm:$0xf]
      %v501 = vld [vmem:[#allocation2 + $0x8] sm:$0xf]
      %v502 = vld [vmem:[#allocation2 + $0xc] sm:$0xf]
      %v503 = vld [vmem:[#allocation2 + $0x10] sm:$0xf]
      %v504 = vld [vmem:[#allocation2 + $0x14] sm:$0xf]
      %v505 = vld [vmem:[#allocation2 + $0x18] sm:$0xf]
      %v506 = vld [vmem:[#allocation2 + $0x1c] sm:$0xf]
      %v507 = vld [vmem:[#allocation2 + $0x20] sm:$0xf]
      %v508 = vld [vmem:[#allocation2 + $0x24] sm:$0xf]
      %v509 = vld [vmem:[#allocation2 + $0x28] sm:$0xf]
      %v510 = vld [vmem:[#allocation2 + $0x2c] sm:$0xf]
      %v511 = vld [vmem:[#allocation2 + $0x30] sm:$0xf]
      %v512 = vld [vmem:[#allocation2 + $0x34] sm:$0xf]
      %v513 = vld [vmem:[#allocation2 + $0x38] sm:$0xf]
      %v514 = vld [vmem:[#allocation2 + $0x3c] sm:$0xf]
      %v515 = vld [vmem:[%s3] sm:$0xf]
      %v516 = vld [vmem:[%s3 + $0x4] sm:$0xf]
      %v517 = vld [vmem:[%s3 + $0x8] sm:$0xf]
      %v518 = vld [vmem:[%s3 + $0xc] sm:$0xf]
      %v519 = vld [vmem:[%s3 + $0x10] sm:$0xf]
      %v520 = vld [vmem:[%s3 + $0x14] sm:$0xf]
      %v521 = vld [vmem:[%s3 + $0x18] sm:$0xf]
      %v522 = vld [vmem:[%s3 + $0x1c] sm:$0xf]
      %v523 = vld [vmem:[%s4] sm:$0x1]
      %v525 = vperm.slane %v523, 0
      %v543 = vunpack.c.l.b16 %v499
      %v544 = vunpack.c.l.b16 %v500
      %v545 = vunpack.c.l.b16 %v501
      %v546 = vunpack.c.l.b16 %v502
      %v547 = vunpack.c.l.b16 %v503
      %v548 = vunpack.c.l.b16 %v504
      %v549 = vunpack.c.l.b16 %v505
      %v550 = vunpack.c.l.b16 %v506
      %v551 = vunpack.c.l.b16 %v507
      %v552 = vunpack.c.l.b16 %v508
      %v553 = vunpack.c.l.b16 %v509
      %v554 = vunpack.c.l.b16 %v510
      %v555 = vunpack.c.l.b16 %v511
      %v556 = vunpack.c.l.b16 %v512
      %v557 = vunpack.c.l.b16 %v513
      %v558 = vunpack.c.l.b16 %v514
      %v559 = vpack.c.b16 %v544, %v543
      %v560 = vpack.c.b16 %v546, %v545
      %v561 = vpack.c.b16 %v548, %v547
      %v562 = vpack.c.b16 %v550, %v549
      %v563 = vpack.c.b16 %v552, %v551
      %v564 = vpack.c.b16 %v554, %v553
      %v565 = vpack.c.b16 %v556, %v555
      %v566 = vpack.c.b16 %v558, %v557
      %v575 = vunpack.c.l.b16 %v515
      %v576 = vunpack.c.l.b16 %v516
      %v577 = vunpack.c.l.b16 %v517
      %v578 = vunpack.c.l.b16 %v518
      %v579 = vunpack.c.l.b16 %v519
      %v580 = vunpack.c.l.b16 %v520
      %v581 = vunpack.c.l.b16 %v521
      %v582 = vunpack.c.l.b16 %v522
      %v583 = vpack.c.b16 %v576, %v575
      %v584 = vpack.c.b16 %v578, %v577
      %v585 = vpack.c.b16 %v580, %v579
      %v586 = vpack.c.b16 %v582, %v581
      %v592 = vsel %vm376, %v559, 0
      %v595 = vsel %vm376, %v560, 0
      %v598 = vsel %vm376, %v561, 0
      %v601 = vsel %vm376, %v562, 0
      %v604 = vsel %vm376, %v563, 0
      %v607 = vsel %vm376, %v564, 0
      %v610 = vsel %vm376, %v565, 0
      %v613 = vsel %vm376, %v566, 0
      %615 = vmatpush.bf16.msra.mxu0 0
      %616 = vmatpush.bf16.msra.mxu0 0
      %617 = vmatpush.bf16.msra.mxu0 0
      %618 = vmatpush.bf16.msra.mxu0 0
      %619 = vmatpush.bf16.msra.mxu0 %v586
      %620 = vmatpush.bf16.msra.mxu0 %v585
      %621 = vmatpush.bf16.msra.mxu0 %v584
      %622 = vmatpush.bf16.msra.mxu0 %v583
      %623 = vmatmul.bf16.gmra.mxu0 %v592
      %v624 = vpop.f32.mrf.mxu0
      %v625 = vadd.f32 %v525, %v624
      %v626 = vpop.f32.mrf.mxu0
      %v627 = vadd.f32 %v525, %v626
      %628 = vmatmul.bf16.gmra.mxu0 %v595
      %v629 = vpop.f32.mrf.mxu0
      %v630 = vadd.f32 %v525, %v629
      %v631 = vpop.f32.mrf.mxu0
      %v632 = vadd.f32 %v525, %v631
      %633 = vmatmul.bf16.gmra.mxu0 %v598
      %v634 = vpop.f32.mrf.mxu0
      %v635 = vadd.f32 %v525, %v634
      %v636 = vpop.f32.mrf.mxu0
      %v637 = vadd.f32 %v525, %v636
      %638 = vmatmul.bf16.gmra.mxu0 %v601
      %v639 = vpop.f32.mrf.mxu0
      %v640 = vadd.f32 %v525, %v639
      %v641 = vpop.f32.mrf.mxu0
      %v642 = vadd.f32 %v525, %v641
      %643 = vmatmul.bf16.gmra.mxu0 %v604
      %v644 = vpop.f32.mrf.mxu0
      %v645 = vadd.f32 %v525, %v644
      %v646 = vpop.f32.mrf.mxu0
      %v647 = vadd.f32 %v525, %v646
      %648 = vmatmul.bf16.gmra.mxu0 %v607
      %v649 = vpop.f32.mrf.mxu0
      %v650 = vadd.f32 %v525, %v649
      %v651 = vpop.f32.mrf.mxu0
      %v652 = vadd.f32 %v525, %v651
      %653 = vmatmul.bf16.gmra.mxu0 %v610
      %v654 = vpop.f32.mrf.mxu0
      %v655 = vadd.f32 %v525, %v654
      %v656 = vpop.f32.mrf.mxu0
      %v657 = vadd.f32 %v525, %v656
      %658 = vmatmul.bf16.gmra.mxu0 %v613
      %v659 = vpop.f32.mrf.mxu0
      %v660 = vadd.f32 %v525, %v659
      %v661 = vpop.f32.mrf.mxu0
      %v662 = vadd.f32 %v525, %v661
      %663 = vdwg.mxu0
      %v664 = vmax.f32 %v625, 0.0
      %v665 = vmax.f32 %v627, 0.0
      %v666 = vmax.f32 %v630, 0.0
      %v667 = vmax.f32 %v632, 0.0
      %v668 = vmax.f32 %v635, 0.0
      %v669 = vmax.f32 %v637, 0.0
      %v670 = vmax.f32 %v640, 0.0
      %v671 = vmax.f32 %v642, 0.0
      %v672 = vmax.f32 %v645, 0.0
      %v673 = vmax.f32 %v647, 0.0
      %v674 = vmax.f32 %v650, 0.0
      %v675 = vmax.f32 %v652, 0.0
      %v676 = vmax.f32 %v655, 0.0
      %v677 = vmax.f32 %v657, 0.0
      %v678 = vmax.f32 %v660, 0.0
      %v679 = vmax.f32 %v662, 0.0
      %v680 = vld [vmem:[%s5] sm:$0x1]
      %v682 = vperm.slane %v680, 0
      %v684 = vmul.f32 %v664, %v682
      %v685 = vmul.f32 %v665, %v682
      %v686 = vmul.f32 %v666, %v682
      %v687 = vmul.f32 %v667, %v682
      %v688 = vmul.f32 %v668, %v682
      %v689 = vmul.f32 %v669, %v682
      %v690 = vmul.f32 %v670, %v682
      %v691 = vmul.f32 %v671, %v682
      %v692 = vmul.f32 %v672, %v682
      %v693 = vmul.f32 %v673, %v682
      %v694 = vmul.f32 %v674, %v682
      %v695 = vmul.f32 %v675, %v682
      %v696 = vmul.f32 %v676, %v682
      %v697 = vmul.f32 %v677, %v682
      %v698 = vmul.f32 %v678, %v682
      %v699 = vmul.f32 %v679, %v682
      %v700 = vsel %vm376, %v684, 0.0
      %701 = vadd.xlane.f32.xlu0 %v700
      %v702 = vpop.xlane.xlu0 %701
      %v703 = vsel %vm376, %v685, 0.0
      %704 = vadd.xlane.f32.xlu0 %v703
      %v705 = vpop.xlane.xlu0 %704
      %v706 = vsel %vm376, %v686, 0.0
      %707 = vadd.xlane.f32.xlu0 %v706
      %v708 = vpop.xlane.xlu0 %707
      %v709 = vsel %vm376, %v687, 0.0
      %710 = vadd.xlane.f32.xlu0 %v709
      %v711 = vpop.xlane.xlu0 %710
      %v712 = vsel %vm376, %v688, 0.0
      %713 = vadd.xlane.f32.xlu0 %v712
      %v714 = vpop.xlane.xlu0 %713
      %v715 = vsel %vm376, %v689, 0.0
      %716 = vadd.xlane.f32.xlu0 %v715
      %v717 = vpop.xlane.xlu0 %716
      %v718 = vsel %vm376, %v690, 0.0
      %719 = vadd.xlane.f32.xlu0 %v718
      %v720 = vpop.xlane.xlu0 %719
      %v721 = vsel %vm376, %v691, 0.0
      %722 = vadd.xlane.f32.xlu0 %v721
      %v723 = vpop.xlane.xlu0 %722
      %v724 = vsel %vm376, %v692, 0.0
      %725 = vadd.xlane.f32.xlu0 %v724
      %v726 = vpop.xlane.xlu0 %725
      %v727 = vsel %vm376, %v693, 0.0
      %728 = vadd.xlane.f32.xlu0 %v727
      %v729 = vpop.xlane.xlu0 %728
      %v730 = vsel %vm376, %v694, 0.0
      %731 = vadd.xlane.f32.xlu0 %v730
      %v732 = vpop.xlane.xlu0 %731
      %v733 = vsel %vm376, %v695, 0.0
      %734 = vadd.xlane.f32.xlu0 %v733
      %v735 = vpop.xlane.xlu0 %734
      %v736 = vsel %vm376, %v696, 0.0
      %737 = vadd.xlane.f32.xlu0 %v736
      %v738 = vpop.xlane.xlu0 %737
      %v739 = vsel %vm376, %v697, 0.0
      %740 = vadd.xlane.f32.xlu0 %v739
      %v741 = vpop.xlane.xlu0 %740
      %v742 = vsel %vm376, %v698, 0.0
      %743 = vadd.xlane.f32.xlu0 %v742
      %v744 = vpop.xlane.xlu0 %743
      %v745 = vsel %vm376, %v699, 0.0
      %746 = vadd.xlane.f32.xlu0 %v745
      %v747 = vpop.xlane.xlu0 %746
      %s748 = sld [smem:[#allocation3]]
      %v749 = vstv %s748
      %v750 = vadd.f32 %v702, %v749
      %v751 = vadd.f32 %v705, %v749
      %v752 = vadd.f32 %v708, %v749
      %v753 = vadd.f32 %v711, %v749
      %v754 = vadd.f32 %v714, %v749
      %v755 = vadd.f32 %v717, %v749
      %v756 = vadd.f32 %v720, %v749
      %v757 = vadd.f32 %v723, %v749
      %v758 = vadd.f32 %v726, %v749
      %v759 = vadd.f32 %v729, %v749
      %v760 = vadd.f32 %v732, %v749
      %v761 = vadd.f32 %v735, %v749
      %v762 = vadd.f32 %v738, %v749
      %v763 = vadd.f32 %v741, %v749
      %v764 = vadd.f32 %v744, %v749
      %v765 = vadd.f32 %v747, %v749
      %v766 = vxor.u32 %v750, 2147483648
      %v767 = vxor.u32 %v751, 2147483648
      %v768 = vxor.u32 %v752, 2147483648
      %v769 = vxor.u32 %v753, 2147483648
      %v770 = vxor.u32 %v754, 2147483648
      %v771 = vxor.u32 %v755, 2147483648
      %v772 = vxor.u32 %v756, 2147483648
      %v773 = vxor.u32 %v757, 2147483648
      %v774 = vxor.u32 %v758, 2147483648
      %v775 = vxor.u32 %v759, 2147483648
      %v776 = vxor.u32 %v760, 2147483648
      %v777 = vxor.u32 %v761, 2147483648
      %v778 = vxor.u32 %v762, 2147483648
      %v779 = vxor.u32 %v763, 2147483648
      %v780 = vxor.u32 %v764, 2147483648
      %v781 = vxor.u32 %v765, 2147483648
      %v782 = vmul.f32 %v766, 1.442695
      %v783 = vpow.pop %v782
      %v784 = vmul.f32 %v767, 1.442695
      %v785 = vpow.pop %v784
      %v786 = vmul.f32 %v768, 1.442695
      %v787 = vpow.pop %v786
      %v788 = vmul.f32 %v769, 1.442695
      %v789 = vpow.pop %v788
      %v790 = vmul.f32 %v770, 1.442695
      %v791 = vpow.pop %v790
      %v792 = vmul.f32 %v771, 1.442695
      %v793 = vpow.pop %v792
      %v794 = vmul.f32 %v772, 1.442695
      %v795 = vpow.pop %v794
      %v796 = vmul.f32 %v773, 1.442695
      %v797 = vpow.pop %v796
      %v798 = vmul.f32 %v774, 1.442695
      %v799 = vpow.pop %v798
      %v800 = vmul.f32 %v775, 1.442695
      %v801 = vpow.pop %v800
      %v802 = vmul.f32 %v776, 1.442695
      %v803 = vpow.pop %v802
      %v804 = vmul.f32 %v777, 1.442695
      %v805 = vpow.pop %v804
      %v806 = vmul.f32 %v778, 1.442695
      %v807 = vpow.pop %v806
      %v808 = vmul.f32 %v779, 1.442695
      %v809 = vpow.pop %v808
      %v810 = vmul.f32 %v780, 1.442695
      %v811 = vpow.pop %v810
      %v812 = vmul.f32 %v781, 1.442695
      %v813 = vpow.pop %v812
      %v814 = vadd.f32 %v783, 1.0
      %v815 = vadd.f32 %v785, 1.0
      %v816 = vadd.f32 %v787, 1.0
      %v817 = vadd.f32 %v789, 1.0
      %v818 = vadd.f32 %v791, 1.0
      %v819 = vadd.f32 %v793, 1.0
      %v820 = vadd.f32 %v795, 1.0
      %v821 = vadd.f32 %v797, 1.0
      %v822 = vadd.f32 %v799, 1.0
      %v823 = vadd.f32 %v801, 1.0
      %v824 = vadd.f32 %v803, 1.0
      %v825 = vadd.f32 %v805, 1.0
      %v826 = vadd.f32 %v807, 1.0
      %v827 = vadd.f32 %v809, 1.0
      %v828 = vadd.f32 %v811, 1.0
      %v829 = vadd.f32 %v813, 1.0
      %v830 = vrcp.pop %v814
      %v831 = vmul.f32 %v814, %v830
      %v832 = vsub.f32 1.0, %v831
      %v833 = vmul.f32 %v830, %v832
      %v834 = vadd.f32 %v830, %v833
      %vm835 = vweird.f32 %v814
      %vm836 = vweird.f32 %v830
      %vm837 = vmor %vm835, %vm836
      %v838 = vsel %vm837, %v830, %v834
      %v839 = vand.u32 2147483647, %v814
      %vm840 = vcmp.eq.f32.partialorder %v839, 8.507059e+37
      %v841 = vand.u32 %v814, 2147483648
      %v842 = vor.u32 1.1754944e-38, %v841
      %v843 = vsel %vm840, %v842, %v838
      %v844 = vmul.f32 1.0, %v843
      %v845 = vrcp.pop %v815
      %v846 = vmul.f32 %v815, %v845
      %v847 = vsub.f32 1.0, %v846
      %v848 = vmul.f32 %v845, %v847
      %v849 = vadd.f32 %v845, %v848
      %vm850 = vweird.f32 %v815
      %vm851 = vweird.f32 %v845
      %vm852 = vmor %vm850, %vm851
      %v853 = vsel %vm852, %v845, %v849
      %v854 = vand.u32 2147483647, %v815
      %vm855 = vcmp.eq.f32.partialorder %v854, 8.507059e+37
      %v856 = vand.u32 %v815, 2147483648
      %v857 = vor.u32 1.1754944e-38, %v856
      %v858 = vsel %vm855, %v857, %v853
      %v859 = vmul.f32 1.0, %v858
      %v860 = vrcp.pop %v816
      %v861 = vmul.f32 %v816, %v860
      %v862 = vsub.f32 1.0, %v861
      %v863 = vmul.f32 %v860, %v862
      %v864 = vadd.f32 %v860, %v863
      %vm865 = vweird.f32 %v816
      %vm866 = vweird.f32 %v860
      %vm867 = vmor %vm865, %vm866
      %v868 = vsel %vm867, %v860, %v864
      %v869 = vand.u32 2147483647, %v816
      %vm870 = vcmp.eq.f32.partialorder %v869, 8.507059e+37
      %v871 = vand.u32 %v816, 2147483648
      %v872 = vor.u32 1.1754944e-38, %v871
      %v873 = vsel %vm870, %v872, %v868
      %v874 = vmul.f32 1.0, %v873
      %v875 = vrcp.pop %v817
      %v876 = vmul.f32 %v817, %v875
      %v877 = vsub.f32 1.0, %v876
      %v878 = vmul.f32 %v875, %v877
      %v879 = vadd.f32 %v875, %v878
      %vm880 = vweird.f32 %v817
      %vm881 = vweird.f32 %v875
      %vm882 = vmor %vm880, %vm881
      %v883 = vsel %vm882, %v875, %v879
      %v884 = vand.u32 2147483647, %v817
      %vm885 = vcmp.eq.f32.partialorder %v884, 8.507059e+37
      %v886 = vand.u32 %v817, 2147483648
      %v887 = vor.u32 1.1754944e-38, %v886
      %v888 = vsel %vm885, %v887, %v883
      %v889 = vmul.f32 1.0, %v888
      %v890 = vrcp.pop %v818
      %v891 = vmul.f32 %v818, %v890
      %v892 = vsub.f32 1.0, %v891
      %v893 = vmul.f32 %v890, %v892
      %v894 = vadd.f32 %v890, %v893
      %vm895 = vweird.f32 %v818
      %vm896 = vweird.f32 %v890
      %vm897 = vmor %vm895, %vm896
      %v898 = vsel %vm897, %v890, %v894
      %v899 = vand.u32 2147483647, %v818
      %vm900 = vcmp.eq.f32.partialorder %v899, 8.507059e+37
      %v901 = vand.u32 %v818, 2147483648
      %v902 = vor.u32 1.1754944e-38, %v901
      %v903 = vsel %vm900, %v902, %v898
      %v904 = vmul.f32 1.0, %v903
      %v905 = vrcp.pop %v819
      %v906 = vmul.f32 %v819, %v905
      %v907 = vsub.f32 1.0, %v906
      %v908 = vmul.f32 %v905, %v907
      %v909 = vadd.f32 %v905, %v908
      %vm910 = vweird.f32 %v819
      %vm911 = vweird.f32 %v905
      %vm912 = vmor %vm910, %vm911
      %v913 = vsel %vm912, %v905, %v909
      %v914 = vand.u32 2147483647, %v819
      %vm915 = vcmp.eq.f32.partialorder %v914, 8.507059e+37
      %v916 = vand.u32 %v819, 2147483648
      %v917 = vor.u32 1.1754944e-38, %v916
      %v918 = vsel %vm915, %v917, %v913
      %v919 = vmul.f32 1.0, %v918
      %v920 = vrcp.pop %v820
      %v921 = vmul.f32 %v820, %v920
      %v922 = vsub.f32 1.0, %v921
      %v923 = vmul.f32 %v920, %v922
      %v924 = vadd.f32 %v920, %v923
      %vm925 = vweird.f32 %v820
      %vm926 = vweird.f32 %v920
      %vm927 = vmor %vm925, %vm926
      %v928 = vsel %vm927, %v920, %v924
      %v929 = vand.u32 2147483647, %v820
      %vm930 = vcmp.eq.f32.partialorder %v929, 8.507059e+37
      %v931 = vand.u32 %v820, 2147483648
      %v932 = vor.u32 1.1754944e-38, %v931
      %v933 = vsel %vm930, %v932, %v928
      %v934 = vmul.f32 1.0, %v933
      %v935 = vrcp.pop %v821
      %v936 = vmul.f32 %v821, %v935
      %v937 = vsub.f32 1.0, %v936
      %v938 = vmul.f32 %v935, %v937
      %v939 = vadd.f32 %v935, %v938
      %vm940 = vweird.f32 %v821
      %vm941 = vweird.f32 %v935
      %vm942 = vmor %vm940, %vm941
      %v943 = vsel %vm942, %v935, %v939
      %v944 = vand.u32 2147483647, %v821
      %vm945 = vcmp.eq.f32.partialorder %v944, 8.507059e+37
      %v946 = vand.u32 %v821, 2147483648
      %v947 = vor.u32 1.1754944e-38, %v946
      %v948 = vsel %vm945, %v947, %v943
      %v949 = vmul.f32 1.0, %v948
      %v950 = vrcp.pop %v822
      %v951 = vmul.f32 %v822, %v950
      %v952 = vsub.f32 1.0, %v951
      %v953 = vmul.f32 %v950, %v952
      %v954 = vadd.f32 %v950, %v953
      %vm955 = vweird.f32 %v822
      %vm956 = vweird.f32 %v950
      %vm957 = vmor %vm955, %vm956
      %v958 = vsel %vm957, %v950, %v954
      %v959 = vand.u32 2147483647, %v822
      %vm960 = vcmp.eq.f32.partialorder %v959, 8.507059e+37
      %v961 = vand.u32 %v822, 2147483648
      %v962 = vor.u32 1.1754944e-38, %v961
      %v963 = vsel %vm960, %v962, %v958
      %v964 = vmul.f32 1.0, %v963
      %v965 = vrcp.pop %v823
      %v966 = vmul.f32 %v823, %v965
      %v967 = vsub.f32 1.0, %v966
      %v968 = vmul.f32 %v965, %v967
      %v969 = vadd.f32 %v965, %v968
      %vm970 = vweird.f32 %v823
      %vm971 = vweird.f32 %v965
      %vm972 = vmor %vm970, %vm971
      %v973 = vsel %vm972, %v965, %v969
      %v974 = vand.u32 2147483647, %v823
      %vm975 = vcmp.eq.f32.partialorder %v974, 8.507059e+37
      %v976 = vand.u32 %v823, 2147483648
      %v977 = vor.u32 1.1754944e-38, %v976
      %v978 = vsel %vm975, %v977, %v973
      %v979 = vmul.f32 1.0, %v978
      %v980 = vrcp.pop %v824
      %v981 = vmul.f32 %v824, %v980
      %v982 = vsub.f32 1.0, %v981
      %v983 = vmul.f32 %v980, %v982
      %v984 = vadd.f32 %v980, %v983
      %vm985 = vweird.f32 %v824
      %vm986 = vweird.f32 %v980
      %vm987 = vmor %vm985, %vm986
      %v988 = vsel %vm987, %v980, %v984
      %v989 = vand.u32 2147483647, %v824
      %vm990 = vcmp.eq.f32.partialorder %v989, 8.507059e+37
      %v991 = vand.u32 %v824, 2147483648
      %v992 = vor.u32 1.1754944e-38, %v991
      %v993 = vsel %vm990, %v992, %v988
      %v994 = vmul.f32 1.0, %v993
      %v995 = vrcp.pop %v825
      %v996 = vmul.f32 %v825, %v995
      %v997 = vsub.f32 1.0, %v996
      %v998 = vmul.f32 %v995, %v997
      %v999 = vadd.f32 %v995, %v998
      %vm1000 = vweird.f32 %v825
      %vm1001 = vweird.f32 %v995
      %vm1002 = vmor %vm1000, %vm1001
      %v1003 = vsel %vm1002, %v995, %v999
      %v1004 = vand.u32 2147483647, %v825
      %vm1005 = vcmp.eq.f32.partialorder %v1004, 8.507059e+37
      %v1006 = vand.u32 %v825, 2147483648
      %v1007 = vor.u32 1.1754944e-38, %v1006
      %v1008 = vsel %vm1005, %v1007, %v1003
      %v1009 = vmul.f32 1.0, %v1008
      %v1010 = vrcp.pop %v826
      %v1011 = vmul.f32 %v826, %v1010
      %v1012 = vsub.f32 1.0, %v1011
      %v1013 = vmul.f32 %v1010, %v1012
      %v1014 = vadd.f32 %v1010, %v1013
      %vm1015 = vweird.f32 %v826
      %vm1016 = vweird.f32 %v1010
      %vm1017 = vmor %vm1015, %vm1016
      %v1018 = vsel %vm1017, %v1010, %v1014
      %v1019 = vand.u32 2147483647, %v826
      %vm1020 = vcmp.eq.f32.partialorder %v1019, 8.507059e+37
      %v1021 = vand.u32 %v826, 2147483648
      %v1022 = vor.u32 1.1754944e-38, %v1021
      %v1023 = vsel %vm1020, %v1022, %v1018
      %v1024 = vmul.f32 1.0, %v1023
      %v1025 = vrcp.pop %v827
      %v1026 = vmul.f32 %v827, %v1025
      %v1027 = vsub.f32 1.0, %v1026
      %v1028 = vmul.f32 %v1025, %v1027
      %v1029 = vadd.f32 %v1025, %v1028
      %vm1030 = vweird.f32 %v827
      %vm1031 = vweird.f32 %v1025
      %vm1032 = vmor %vm1030, %vm1031
      %v1033 = vsel %vm1032, %v1025, %v1029
      %v1034 = vand.u32 2147483647, %v827
      %vm1035 = vcmp.eq.f32.partialorder %v1034, 8.507059e+37
      %v1036 = vand.u32 %v827, 2147483648
      %v1037 = vor.u32 1.1754944e-38, %v1036
      %v1038 = vsel %vm1035, %v1037, %v1033
      %v1039 = vmul.f32 1.0, %v1038
      %v1040 = vrcp.pop %v828
      %v1041 = vmul.f32 %v828, %v1040
      %v1042 = vsub.f32 1.0, %v1041
      %v1043 = vmul.f32 %v1040, %v1042
      %v1044 = vadd.f32 %v1040, %v1043
      %vm1045 = vweird.f32 %v828
      %vm1046 = vweird.f32 %v1040
      %vm1047 = vmor %vm1045, %vm1046
      %v1048 = vsel %vm1047, %v1040, %v1044
      %v1049 = vand.u32 2147483647, %v828
      %vm1050 = vcmp.eq.f32.partialorder %v1049, 8.507059e+37
      %v1051 = vand.u32 %v828, 2147483648
      %v1052 = vor.u32 1.1754944e-38, %v1051
      %v1053 = vsel %vm1050, %v1052, %v1048
      %v1054 = vmul.f32 1.0, %v1053
      %v1055 = vrcp.pop %v829
      %v1056 = vmul.f32 %v829, %v1055
      %v1057 = vsub.f32 1.0, %v1056
      %v1058 = vmul.f32 %v1055, %v1057
      %v1059 = vadd.f32 %v1055, %v1058
      %vm1060 = vweird.f32 %v829
      %vm1061 = vweird.f32 %v1055
      %vm1062 = vmor %vm1060, %vm1061
      %v1063 = vsel %vm1062, %v1055, %v1059
      %v1064 = vand.u32 2147483647, %v829
      %vm1065 = vcmp.eq.f32.partialorder %v1064, 8.507059e+37
      %v1066 = vand.u32 %v829, 2147483648
      %v1067 = vor.u32 1.1754944e-38, %v1066
      %v1068 = vsel %vm1065, %v1067, %v1063
      %v1069 = vmul.f32 1.0, %v1068
      %vm1070 = vcmask 7168
      %1071 = vst.msk [vmem:[%s281] sm:$0xff] %vm1070, %v844
      %1072 = vst.msk [vmem:[%s281 + $0x8] sm:$0xff] %vm1070, %v859
      %1073 = vst.msk [vmem:[%s281 + $0x10] sm:$0xff] %vm1070, %v874
      %1074 = vst.msk [vmem:[%s281 + $0x18] sm:$0xff] %vm1070, %v889
      %1075 = vst.msk [vmem:[%s281 + $0x20] sm:$0xff] %vm1070, %v904
      %1076 = vst.msk [vmem:[%s281 + $0x28] sm:$0xff] %vm1070, %v919
      %1077 = vst.msk [vmem:[%s281 + $0x30] sm:$0xff] %vm1070, %v934
      %1078 = vst.msk [vmem:[%s281 + $0x38] sm:$0xff] %vm1070, %v949
      %1079 = vst.msk [vmem:[%s281 + $0x40] sm:$0xff] %vm1070, %v964
      %1080 = vst.msk [vmem:[%s281 + $0x48] sm:$0xff] %vm1070, %v979
      %1081 = vst.msk [vmem:[%s281 + $0x50] sm:$0xff] %vm1070, %v994
      %1082 = vst.msk [vmem:[%s281 + $0x58] sm:$0xff] %vm1070, %v1009
      %1083 = vst.msk [vmem:[%s281 + $0x60] sm:$0xff] %vm1070, %v1024
      %1084 = vst.msk [vmem:[%s281 + $0x68] sm:$0xff] %vm1070, %v1039
      %1085 = vst.msk [vmem:[%s281 + $0x70] sm:$0xff] %vm1070, %v1054
      %1086 = vst.msk [vmem:[%s281 + $0x78] sm:$0xff] %vm1070, %v1069
      %s1087 = smul.u32 16, %s19
      %p1088 = scmp.lt.s32.totalorder %s1087, 31
      %s1089 = scalar_select %p1088, %s1087, 31
      %s1090 = smul.addr %s1089, 8
      %s1091 = scalar_lea.vmem %s7, %s1090
      // Predicated region
      $region49: #{tpu_custom_call.1} parent=47 // pred_check
        %p1092 = pneg %p189
      $region50: #{tpu_custom_call.1} parent=47 // pred_check_branch
        %1094 = sbr.rel (%p1092) target = $region52
      $region51: #{tpu_custom_call.1} parent=47 // pred_region
        %s1095 = smul.u32 16, %s19
      $region52: #{tpu_custom_call.1} parent=47 // pred_fallthru
        _
    $region48: #{tpu_custom_call.1} parent=5 // pred_fallthru
      _
    %p1096 = scmp.le.s32.totalorder 2, %s14
    // Predicated region
    $region53: #{tpu_custom_call.1} parent=5 // pred_check
      %p1097 = pneg %p1096
    $region54: #{tpu_custom_call.1} parent=5 // pred_check_branch
      %1099 = sbr.rel (%p1097) target = $region56
    $region55: #{tpu_custom_call.1} parent=5 // pred_region
      %s1100 = ssub.s32 %s14, 2
      // Predicated region
      $region57: #{tpu_custom_call.1} parent=55 // pred_check
        %p1101 = pneg %p195
      $region58: #{tpu_custom_call.1} parent=55 // pred_check_branch
        %1103 = sbr.rel (%p1101) target = $region60
      $region59: #{tpu_custom_call.1} parent=55 // pred_region
        %s1104 = smul.u32 16, %s20
        %p1105 = scmp.lt.s32.totalorder %s1104, 31
        %s1106 = scalar_select %p1105, %s1104, 31
        %s1107 = smul.addr %s1106, 8
        %s1108 = scalar_lea.vmem %s7, %s1107
      $region60: #{tpu_custom_call.1} parent=55 // pred_fallthru
        _
    $region56: #{tpu_custom_call.1} parent=5 // pred_fallthru
      _
  $region6: #{tpu_custom_call.1} parent=0 // loop_footer
    %s18 = sadd.s32 1, %s14
  $region7: #{tpu_custom_call.1} parent=0 // loop_footer_branch
    %13 = sbr.rel target = $region3
  $region8: #{tpu_custom_call.1} parent=0 // loop_exit
    _

</llo_original>
